<compile_context>
chip_gen: v7x
topology: tpu7x:2x2x1
jax: 0.10.0
libtpu: 0.0.40
codegen_flags: <defaults>
</compile_context>

<pallas_src>
import jax
import jax.numpy as jnp
from jax.experimental import pallas as pl
from jax.experimental.pallas import tpu as pltpu


def _gru_fc_kernel(ids_ref, len_ref, embp_ref, whh_ref, bhn_ref, wfc_ref, bfc_ref,
                   logits_ref, pred_ref, h_ref):
    """One time-block of the GRU recurrence + (on the last block) the FC head.

    ids_ref:   (Tblk*Bb, 1)  int32  time-major flattened token ids
    len_ref:   (Bb, 1)       int32  valid sequence lengths
    embp_ref:  (Vpad, 3H)    f32    emb @ W_ih^T with r/z (and n-input) biases folded
    whh_ref:   (H, 3H)       bf16   concatenated hidden weights [r|z|n]
    bhn_ref:   (1, H)        f32    n-gate hidden bias (kept separate, as PyTorch GRU)
    wfc_ref:   (H, C) bf16, bfc_ref: (1, C) f32
    logits_ref:(Bb, C) f32,  pred_ref: (Bb, 1) int32
    h_ref:     (Bb, H) f32 VMEM scratch carried across the time grid
    """
    Bb, H = h_ref.shape
    M = ids_ref.shape[0]
    Tblk = M // Bb
    C = wfc_ref.shape[1]
    V_pad = embp_ref.shape[0]
    t_blk = pl.program_id(0)

    @pl.when(t_blk == 0)
    def _init():
        h_ref[...] = jnp.zeros_like(h_ref)

    # Fused embedding lookup + input projection for the whole time block:
    # one-hot (M, Vpad) @ (Vpad, 3H) -> gi with the input biases already folded.
    ids = ids_ref[...]                                                  # (M, 1)
    onehot = (ids == jax.lax.broadcasted_iota(jnp.int32, (M, V_pad), 1)
              ).astype(jnp.float32)
    gi = jnp.dot(onehot, embp_ref[...],
                 preferred_element_type=jnp.float32)                    # (M, 3H)

    whh = whh_ref[...]                                                  # (H, 3H) bf16
    b_hn = bhn_ref[...]                                                 # (1, H)

    # Hoisted pack_padded_sequence masks for every step in the block
    # (off the serial h->h chain; freeze h once t >= length).
    t0 = t_blk * Tblk
    steps = t0 + jax.lax.broadcasted_iota(jnp.int32, (Tblk, Bb, 1), 0)
    masks = steps < len_ref[...]                                        # (Tblk, Bb, 1)

    h = h_ref[...]                                                      # f32 carry
    # Fully unrolled recurrence over the (static) time block; single fused
    # (Bb, H) @ (H, 3H) hidden matmul per step on the critical path.
    for t in range(Tblk):
        hb = h.astype(jnp.bfloat16)
        gh = jnp.dot(hb, whh, preferred_element_type=jnp.float32)       # (Bb, 3H)
        lo = t * Bb
        gi_t = gi[lo:lo + Bb]                                           # (Bb, 3H)
        r = jax.nn.sigmoid(gi_t[:, 0:H] + gh[:, 0:H])
        z = jax.nn.sigmoid(gi_t[:, H:2 * H] + gh[:, H:2 * H])
        n = jnp.tanh(gi_t[:, 2 * H:3 * H] + r * (gh[:, 2 * H:3 * H] + b_hn))
        h_new = (1.0 - z) * n + z * h
        h = jnp.where(masks[t], h_new, h)
    h_ref[...] = h

    # Classifier head + argmax only on the last time block.
    @pl.when(t_blk == pl.num_programs(0) - 1)
    def _finish():
        logits = jnp.dot(h.astype(jnp.bfloat16), wfc_ref[...],
                         preferred_element_type=jnp.float32) + bfc_ref[...]
        logits_ref[...] = logits
        # torch.max(dim=-1): first index of the maximum value
        col = jax.lax.broadcasted_iota(jnp.int32, (Bb, C), 1)
        max_val = jnp.max(logits, axis=-1, keepdims=True)
        pred_ref[...] = jnp.min(jnp.where(logits == max_val, col, C),
                                axis=-1, keepdims=True)


def _round_up(x, m):
    return (x + m - 1) // m * m


def text_rnn_forward(text, lengths, emb, w_ih, w_hh, b_ih, b_hh, w_fc, b_fc,
                     *, block_t=None):
    """text: (B, T) int token ids, lengths: (B,) valid lengths.
    Returns (logits, pred) shaped like the PyTorch module: (1, B, C), (1, B)."""
    B, T = text.shape
    V, D = emb.shape
    H = w_hh.shape[1]
    C = w_fc.shape[0]

    # Batch padded to 16 sublanes (bf16 packing).  block_t defaults to the whole
    # sequence (single grid step) capped at 256 steps per block for large T.
    B_pad = _round_up(B, 16)
    if block_t is None:
        block_t = min(max(T, 1), 256)
    T_pad = _round_up(T, block_t)
    n_tblk = T_pad // block_t
    V_pad = _round_up(V, 128)

    # Padded rows get length 0 (h stays 0) and token id 0; sliced away at the end.
    ids = jnp.zeros((B_pad, T_pad), jnp.int32).at[:B, :T].set(text.astype(jnp.int32))
    ids_tm = ids.T.reshape(-1, 1)                       # time-major: row = t*B_pad + b
    lens = jnp.zeros((B_pad, 1), jnp.int32).at[:B, 0].set(lengths.astype(jnp.int32))

    f32 = jnp.float32
    emb_f = emb.astype(f32)
    w_ih_f = w_ih.astype(f32)
    b_ih_f = b_ih.astype(f32)
    b_hh_f = b_hh.astype(f32)

    # Frozen embedding x input weights pre-folded into a (V, 3H) projection table;
    # r/z biases folded (b_ih + b_hh), n-gate input bias folded, n-gate hidden
    # bias kept separate (PyTorch GRU semantics).
    b_cat = jnp.concatenate([b_ih_f[0:H] + b_hh_f[0:H],
                             b_ih_f[H:2 * H] + b_hh_f[H:2 * H],
                             b_ih_f[2 * H:3 * H]])
    emb_proj = jnp.dot(emb_f, w_ih_f.T,
                       precision=jax.lax.Precision.HIGHEST) + b_cat[None, :]
    emb_proj = jnp.zeros((V_pad, 3 * H), f32).at[:V].set(emb_proj)

    whh_cat = w_hh.T.astype(jnp.bfloat16)               # (H, 3H) = [r|z|n]
    b_hn = b_hh_f[2 * H:3 * H].reshape(1, H)
    wfc = w_fc.T.astype(jnp.bfloat16)                   # (H, C)
    bfc = b_fc.reshape(1, C).astype(f32)

    full = lambda t: (0, 0)
    logits, pred = pl.pallas_call(
        _gru_fc_kernel,
        out_shape=(
            jax.ShapeDtypeStruct((B_pad, C), f32),
            jax.ShapeDtypeStruct((B_pad, 1), jnp.int32),
        ),
        grid_spec=pltpu.PrefetchScalarGridSpec(
            num_scalar_prefetch=0,
            grid=(n_tblk,),
            in_specs=[
                pl.BlockSpec((block_t * B_pad, 1), lambda t: (t, 0)),   # token ids
                pl.BlockSpec((B_pad, 1), full),                         # lengths
                pl.BlockSpec((V_pad, 3 * H), full),                     # emb @ W_ih + b
                pl.BlockSpec((H, 3 * H), full),                         # W_hh cat
                pl.BlockSpec((1, H), full),                             # b_hn
                pl.BlockSpec((H, C), full),                             # W_fc
                pl.BlockSpec((1, C), full),                             # b_fc
            ],
            out_specs=[
                pl.BlockSpec((B_pad, C), full),
                pl.BlockSpec((B_pad, 1), full),
            ],
            scratch_shapes=[pltpu.VMEM((B_pad, H), jnp.float32)],
        ),
        compiler_params=pltpu.CompilerParams(
            # The time axis carries the h recurrence -> "arbitrary".
            dimension_semantics=("arbitrary",),
        ),
    )(ids_tm, lens, emb_proj, whh_cat, b_hn, wfc, bfc)

    # nn.GRU hidden state has shape (num_layers*num_directions, B, H) = (1, B, H)
    # so fc(h) -> (1, B, C) and pred -> (1, B).
    return logits[:B].reshape(1, B, C), pred[:B, 0].reshape(1, B)


if __name__ == "__main__":
    # Small config consistent with the module's __init__:
    #   vocab=20, word_dim=16, hidden_size=32, n_classes=4, batch=2, seq=8
    V, D, H, C = 20, 16, 32, 4
    B, T = 2, 8

    key = jax.random.PRNGKey(0)
    ks = jax.random.split(key, 8)
    emb = jax.random.normal(ks[0], (V, D), dtype=jnp.float32) * 0.1
    w_ih = jax.random.normal(ks[1], (3 * H, D), dtype=jnp.float32) * 0.1
    w_hh = jax.random.normal(ks[2], (3 * H, H), dtype=jnp.float32) * 0.1
    b_ih = jax.random.normal(ks[3], (3 * H,), dtype=jnp.float32) * 0.1
    b_hh = jax.random.normal(ks[4], (3 * H,), dtype=jnp.float32) * 0.1
    w_fc = jax.random.normal(ks[5], (C, H), dtype=jnp.float32) * 0.1
    b_fc = jax.random.normal(ks[6], (C,), dtype=jnp.float32) * 0.1

    text = jax.random.randint(ks[7], (B, T), 0, V, dtype=jnp.int32)
    lengths = jnp.array([T, T - 3], dtype=jnp.int32)  # variable-length sequences

    logits, pred = text_rnn_forward(text, lengths, emb,
                                    w_ih, w_hh, b_ih, b_hh, w_fc, b_fc)
    jax.block_until_ready((logits, pred))
    assert logits.shape == (1, B, C) and pred.shape == (1, B)
    assert bool(jnp.all(jnp.isfinite(logits)))
    print("KERNEL_OK")
</pallas_src>

<mosaic_0001>
module attributes {stable_mosaic.version = 11 : i64} {
  func.func @_gru_fc_kernel(%arg0: i32, %arg1: memref<128x1xi32, #tpu.memory_space<vmem>>, %arg2: memref<16x1xi32, #tpu.memory_space<vmem>>, %arg3: memref<128x96xf32, #tpu.memory_space<vmem>>, %arg4: memref<32x96xbf16, #tpu.memory_space<vmem>>, %arg5: memref<1x32xf32, #tpu.memory_space<vmem>>, %arg6: memref<32x4xbf16, #tpu.memory_space<vmem>>, %arg7: memref<1x4xf32, #tpu.memory_space<vmem>>, %arg8: memref<16x4xf32, #tpu.memory_space<vmem>>, %arg9: memref<16x1xi32, #tpu.memory_space<vmem>>, %arg10: memref<16x32xf32, #tpu.memory_space<vmem>>) attributes {dimension_semantics = [#tpu.dimension_semantics<arbitrary>], iteration_bounds = array<i64: 1>, scalar_prefetch = 0 : i64, scratch_operands = 1 : i64, tpu.core_type = #tpu.core_type<tc>, window_params = [{transform_indices = @transform_0, window_bounds = array<i64: 128, 1>}, {pipeline_mode = #tpu.pipeline_mode<synchronous>, transform_indices = @transform_1, window_bounds = array<i64: 16, 1>}, {pipeline_mode = #tpu.pipeline_mode<synchronous>, transform_indices = @transform_2, window_bounds = array<i64: 128, 96>}, {pipeline_mode = #tpu.pipeline_mode<synchronous>, transform_indices = @transform_3, window_bounds = array<i64: 32, 96>}, {pipeline_mode = #tpu.pipeline_mode<synchronous>, transform_indices = @transform_4, window_bounds = array<i64: 1, 32>}, {pipeline_mode = #tpu.pipeline_mode<synchronous>, transform_indices = @transform_5, window_bounds = array<i64: 32, 4>}, {pipeline_mode = #tpu.pipeline_mode<synchronous>, transform_indices = @transform_6, window_bounds = array<i64: 1, 4>}, {pipeline_mode = #tpu.pipeline_mode<synchronous>, transform_indices = @transform_7, window_bounds = array<i64: 16, 4>}, {pipeline_mode = #tpu.pipeline_mode<synchronous>, transform_indices = @transform_8, window_bounds = array<i64: 16, 1>}]} {
    %c0_i32 = arith.constant 0 : i32
    %0 = arith.cmpi eq, %arg0, %c0_i32 : i32
    %1 = arith.extui %0 : i1 to i32
    %c0_i32_0 = arith.constant 0 : i32
    %2 = arith.cmpi ne, %1, %c0_i32_0 : i32
    scf.if %2 {
      %cst_48 = arith.constant 0.000000e+00 : f32
      %314 = vector.broadcast %cst_48 : f32 to vector<16x32xf32>
      %c0_49 = arith.constant 0 : index
      %c0_50 = arith.constant 0 : index
      %315 = vector.load %arg10[%c0_49, %c0_50] : memref<16x32xf32, #tpu.memory_space<vmem>>, vector<16x32xf32>
      tpu.vector_store %arg10[%c0_49, %c0_50], %314 {strides = array<i32>} : memref<16x32xf32, #tpu.memory_space<vmem>>, vector<16x32xf32>,
    } else {
    }
    %c0 = arith.constant 0 : index
    %c0_1 = arith.constant 0 : index
    %3 = vector.load %arg1[%c0, %c0_1] : memref<128x1xi32, #tpu.memory_space<vmem>>, vector<128x1xi32>
    %4 = tpu.iota {dimensions = array<i32: 1>} : vector<128x128xi32>
    %5 = vector.broadcast %3 : vector<128x1xi32> to vector<128x128xi32>
    %6 = arith.cmpi eq, %5, %4 : vector<128x128xi32>
    %7 = arith.extui %6 : vector<128x128xi1> to vector<128x128xi32>
    %8 = arith.sitofp %7 : vector<128x128xi32> to vector<128x128xf32>
    %c0_2 = arith.constant 0 : index
    %c0_3 = arith.constant 0 : index
    %9 = vector.load %arg3[%c0_2, %c0_3] : memref<128x96xf32, #tpu.memory_space<vmem>>, vector<128x96xf32>
    %cst = arith.constant dense<0.000000e+00> : vector<128x96xf32>
    %10 = tpu.matmul %8, %9, %cst {dimension_numbers = #tpu.dot_dimension_numbers<[1], [0], [0], [1], [0, 0, 1, 1], [], []>} : vector<128x128xf32>, vector<128x96xf32>, vector<128x96xf32> -> vector<128x96xf32>
    %c0_4 = arith.constant 0 : index
    %c0_5 = arith.constant 0 : index
    %11 = vector.load %arg4[%c0_4, %c0_5] : memref<32x96xbf16, #tpu.memory_space<vmem>>, vector<32x96xbf16>
    %c0_6 = arith.constant 0 : index
    %c0_7 = arith.constant 0 : index
    %12 = vector.load %arg5[%c0_6, %c0_7] : memref<1x32xf32, #tpu.memory_space<vmem>>, vector<1x32xf32>
    %c8_i32 = arith.constant 8 : i32
    %13 = arith.muli %arg0, %c8_i32 : i32
    %14 = tpu.iota {dimensions = array<i32: 0>} : vector<8x16x1xi32>
    %15 = vector.broadcast %13 : i32 to vector<8x16x1xi32>
    %16 = arith.addi %15, %14 : vector<8x16x1xi32>
    %c0_8 = arith.constant 0 : index
    %c0_9 = arith.constant 0 : index
    %17 = vector.load %arg2[%c0_8, %c0_9] : memref<16x1xi32, #tpu.memory_space<vmem>>, vector<16x1xi32>
    %18 = vector.shape_cast %17 : vector<16x1xi32> to vector<1x16x1xi32>
    %19 = vector.broadcast %18 : vector<1x16x1xi32> to vector<8x16x1xi32>
    %20 = arith.cmpi slt, %16, %19 : vector<8x16x1xi32>
    %c0_10 = arith.constant 0 : index
    %c0_11 = arith.constant 0 : index
    %21 = vector.load %arg10[%c0_10, %c0_11] : memref<16x32xf32, #tpu.memory_space<vmem>>, vector<16x32xf32>
    %22 = arith.truncf %21 : vector<16x32xf32> to vector<16x32xbf16>
    %cst_12 = arith.constant dense<0.000000e+00> : vector<16x96xf32>
    %23 = tpu.matmul %22, %11, %cst_12 {dimension_numbers = #tpu.dot_dimension_numbers<[1], [0], [0], [1], [0, 0, 1, 1], [], []>} : vector<16x32xbf16>, vector<32x96xbf16>, vector<16x96xf32> -> vector<16x96xf32>
    %24 = vector.extract_strided_slice %10 {offsets = [0, 0], sizes = [16, 96], strides = [1, 1]} : vector<128x96xf32> to vector<16x96xf32>
    %25 = vector.extract_strided_slice %24 {offsets = [0, 0], sizes = [16, 32], strides = [1, 1]} : vector<16x96xf32> to vector<16x32xf32>
    %26 = vector.extract_strided_slice %23 {offsets = [0, 0], sizes = [16, 32], strides = [1, 1]} : vector<16x96xf32> to vector<16x32xf32>
    %27 = arith.addf %25, %26 : vector<16x32xf32>
    %28 = arith.negf %27 : vector<16x32xf32>
    %29 = math.exp %28 : vector<16x32xf32>
    %cst_13 = arith.constant 1.000000e+00 : f32
    %30 = vector.broadcast %cst_13 : f32 to vector<16x32xf32>
    %31 = arith.addf %30, %29 : vector<16x32xf32>
    %32 = arith.divf %30, %31 : vector<16x32xf32>
    %33 = vector.extract_strided_slice %24 {offsets = [0, 32], sizes = [16, 32], strides = [1, 1]} : vector<16x96xf32> to vector<16x32xf32>
    %34 = vector.extract_strided_slice %23 {offsets = [0, 32], sizes = [16, 32], strides = [1, 1]} : vector<16x96xf32> to vector<16x32xf32>
    %35 = arith.addf %33, %34 : vector<16x32xf32>
    %36 = arith.negf %35 : vector<16x32xf32>
    %37 = math.exp %36 : vector<16x32xf32>
    %cst_14 = arith.constant 1.000000e+00 : f32
    %38 = vector.broadcast %cst_14 : f32 to vector<16x32xf32>
    %39 = arith.addf %38, %37 : vector<16x32xf32>
    %40 = arith.divf %38, %39 : vector<16x32xf32>
    %41 = vector.extract_strided_slice %24 {offsets = [0, 64], sizes = [16, 32], strides = [1, 1]} : vector<16x96xf32> to vector<16x32xf32>
    %42 = vector.extract_strided_slice %23 {offsets = [0, 64], sizes = [16, 32], strides = [1, 1]} : vector<16x96xf32> to vector<16x32xf32>
    %43 = vector.broadcast %12 : vector<1x32xf32> to vector<16x32xf32>
    %44 = arith.addf %42, %43 : vector<16x32xf32>
    %45 = arith.mulf %32, %44 : vector<16x32xf32>
    %46 = arith.addf %41, %45 : vector<16x32xf32>
    %47 = math.tanh %46 : vector<16x32xf32>
    %cst_15 = arith.constant 1.000000e+00 : f32
    %48 = vector.broadcast %cst_15 : f32 to vector<16x32xf32>
    %49 = arith.subf %48, %40 : vector<16x32xf32>
    %50 = arith.mulf %49, %47 : vector<16x32xf32>
    %51 = arith.mulf %40, %21 : vector<16x32xf32>
    %52 = arith.addf %50, %51 : vector<16x32xf32>
    %53 = vector.extract_strided_slice %20 {offsets = [0, 0, 0], sizes = [1, 16, 1], strides = [1, 1, 1]} : vector<8x16x1xi1> to vector<1x16x1xi1>
    %54 = vector.shape_cast %53 : vector<1x16x1xi1> to vector<16x1xi1>
    %55 = vector.shape_cast %54 : vector<16x1xi1> to vector<16x1xi1>
    %56 = vector.broadcast %55 : vector<16x1xi1> to vector<16x32xi1>
    %57 = arith.select %56, %52, %21 : vector<16x32xi1>, vector<16x32xf32>
    %58 = arith.truncf %57 : vector<16x32xf32> to vector<16x32xbf16>
    %cst_16 = arith.constant dense<0.000000e+00> : vector<16x96xf32>
    %59 = tpu.matmul %58, %11, %cst_16 {dimension_numbers = #tpu.dot_dimension_numbers<[1], [0], [0], [1], [0, 0, 1, 1], [], []>} : vector<16x32xbf16>, vector<32x96xbf16>, vector<16x96xf32> -> vector<16x96xf32>
    %60 = vector.extract_strided_slice %10 {offsets = [16, 0], sizes = [16, 96], strides = [1, 1]} : vector<128x96xf32> to vector<16x96xf32>
    %61 = vector.extract_strided_slice %60 {offsets = [0, 0], sizes = [16, 32], strides = [1, 1]} : vector<16x96xf32> to vector<16x32xf32>
    %62 = vector.extract_strided_slice %59 {offsets = [0, 0], sizes = [16, 32], strides = [1, 1]} : vector<16x96xf32> to vector<16x32xf32>
    %63 = arith.addf %61, %62 : vector<16x32xf32>
    %64 = arith.negf %63 : vector<16x32xf32>
    %65 = math.exp %64 : vector<16x32xf32>
    %cst_17 = arith.constant 1.000000e+00 : f32
    %66 = vector.broadcast %cst_17 : f32 to vector<16x32xf32>
    %67 = arith.addf %66, %65 : vector<16x32xf32>
    %68 = arith.divf %66, %67 : vector<16x32xf32>
    %69 = vector.extract_strided_slice %60 {offsets = [0, 32], sizes = [16, 32], strides = [1, 1]} : vector<16x96xf32> to vector<16x32xf32>
    %70 = vector.extract_strided_slice %59 {offsets = [0, 32], sizes = [16, 32], strides = [1, 1]} : vector<16x96xf32> to vector<16x32xf32>
    %71 = arith.addf %69, %70 : vector<16x32xf32>
    %72 = arith.negf %71 : vector<16x32xf32>
    %73 = math.exp %72 : vector<16x32xf32>
    %cst_18 = arith.constant 1.000000e+00 : f32
    %74 = vector.broadcast %cst_18 : f32 to vector<16x32xf32>
    %75 = arith.addf %74, %73 : vector<16x32xf32>
    %76 = arith.divf %74, %75 : vector<16x32xf32>
    %77 = vector.extract_strided_slice %60 {offsets = [0, 64], sizes = [16, 32], strides = [1, 1]} : vector<16x96xf32> to vector<16x32xf32>
    %78 = vector.extract_strided_slice %59 {offsets = [0, 64], sizes = [16, 32], strides = [1, 1]} : vector<16x96xf32> to vector<16x32xf32>
    %79 = vector.broadcast %12 : vector<1x32xf32> to vector<16x32xf32>
    %80 = arith.addf %78, %79 : vector<16x32xf32>
    %81 = arith.mulf %68, %80 : vector<16x32xf32>
    %82 = arith.addf %77, %81 : vector<16x32xf32>
    %83 = math.tanh %82 : vector<16x32xf32>
    %cst_19 = arith.constant 1.000000e+00 : f32
    %84 = vector.broadcast %cst_19 : f32 to vector<16x32xf32>
    %85 = arith.subf %84, %76 : vector<16x32xf32>
    %86 = arith.mulf %85, %83 : vector<16x32xf32>
    %87 = arith.mulf %76, %57 : vector<16x32xf32>
    %88 = arith.addf %86, %87 : vector<16x32xf32>
    %89 = vector.extract_strided_slice %20 {offsets = [1, 0, 0], sizes = [1, 16, 1], strides = [1, 1, 1]} : vector<8x16x1xi1> to vector<1x16x1xi1>
    %90 = vector.shape_cast %89 : vector<1x16x1xi1> to vector<16x1xi1>
    %91 = vector.shape_cast %90 : vector<16x1xi1> to vector<16x1xi1>
    %92 = vector.broadcast %91 : vector<16x1xi1> to vector<16x32xi1>
    %93 = arith.select %92, %88, %57 : vector<16x32xi1>, vector<16x32xf32>
    %94 = arith.truncf %93 : vector<16x32xf32> to vector<16x32xbf16>
    %cst_20 = arith.constant dense<0.000000e+00> : vector<16x96xf32>
    %95 = tpu.matmul %94, %11, %cst_20 {dimension_numbers = #tpu.dot_dimension_numbers<[1], [0], [0], [1], [0, 0, 1, 1], [], []>} : vector<16x32xbf16>, vector<32x96xbf16>, vector<16x96xf32> -> vector<16x96xf32>
    %96 = vector.extract_strided_slice %10 {offsets = [32, 0], sizes = [16, 96], strides = [1, 1]} : vector<128x96xf32> to vector<16x96xf32>
    %97 = vector.extract_strided_slice %96 {offsets = [0, 0], sizes = [16, 32], strides = [1, 1]} : vector<16x96xf32> to vector<16x32xf32>
    %98 = vector.extract_strided_slice %95 {offsets = [0, 0], sizes = [16, 32], strides = [1, 1]} : vector<16x96xf32> to vector<16x32xf32>
    %99 = arith.addf %97, %98 : vector<16x32xf32>
    %100 = arith.negf %99 : vector<16x32xf32>
    %101 = math.exp %100 : vector<16x32xf32>
    %cst_21 = arith.constant 1.000000e+00 : f32
    %102 = vector.broadcast %cst_21 : f32 to vector<16x32xf32>
    %103 = arith.addf %102, %101 : vector<16x32xf32>
    %104 = arith.divf %102, %103 : vector<16x32xf32>
    %105 = vector.extract_strided_slice %96 {offsets = [0, 32], sizes = [16, 32], strides = [1, 1]} : vector<16x96xf32> to vector<16x32xf32>
    %106 = vector.extract_strided_slice %95 {offsets = [0, 32], sizes = [16, 32], strides = [1, 1]} : vector<16x96xf32> to vector<16x32xf32>
    %107 = arith.addf %105, %106 : vector<16x32xf32>
    %108 = arith.negf %107 : vector<16x32xf32>
    %109 = math.exp %108 : vector<16x32xf32>
    %cst_22 = arith.constant 1.000000e+00 : f32
    %110 = vector.broadcast %cst_22 : f32 to vector<16x32xf32>
    %111 = arith.addf %110, %109 : vector<16x32xf32>
    %112 = arith.divf %110, %111 : vector<16x32xf32>
    %113 = vector.extract_strided_slice %96 {offsets = [0, 64], sizes = [16, 32], strides = [1, 1]} : vector<16x96xf32> to vector<16x32xf32>
    %114 = vector.extract_strided_slice %95 {offsets = [0, 64], sizes = [16, 32], strides = [1, 1]} : vector<16x96xf32> to vector<16x32xf32>
    %115 = vector.broadcast %12 : vector<1x32xf32> to vector<16x32xf32>
    %116 = arith.addf %114, %115 : vector<16x32xf32>
    %117 = arith.mulf %104, %116 : vector<16x32xf32>
    %118 = arith.addf %113, %117 : vector<16x32xf32>
    %119 = math.tanh %118 : vector<16x32xf32>
    %cst_23 = arith.constant 1.000000e+00 : f32
    %120 = vector.broadcast %cst_23 : f32 to vector<16x32xf32>
    %121 = arith.subf %120, %112 : vector<16x32xf32>
    %122 = arith.mulf %121, %119 : vector<16x32xf32>
    %123 = arith.mulf %112, %93 : vector<16x32xf32>
    %124 = arith.addf %122, %123 : vector<16x32xf32>
    %125 = vector.extract_strided_slice %20 {offsets = [2, 0, 0], sizes = [1, 16, 1], strides = [1, 1, 1]} : vector<8x16x1xi1> to vector<1x16x1xi1>
    %126 = vector.shape_cast %125 : vector<1x16x1xi1> to vector<16x1xi1>
    %127 = vector.shape_cast %126 : vector<16x1xi1> to vector<16x1xi1>
    %128 = vector.broadcast %127 : vector<16x1xi1> to vector<16x32xi1>
    %129 = arith.select %128, %124, %93 : vector<16x32xi1>, vector<16x32xf32>
    %130 = arith.truncf %129 : vector<16x32xf32> to vector<16x32xbf16>
    %cst_24 = arith.constant dense<0.000000e+00> : vector<16x96xf32>
    %131 = tpu.matmul %130, %11, %cst_24 {dimension_numbers = #tpu.dot_dimension_numbers<[1], [0], [0], [1], [0, 0, 1, 1], [], []>} : vector<16x32xbf16>, vector<32x96xbf16>, vector<16x96xf32> -> vector<16x96xf32>
    %132 = vector.extract_strided_slice %10 {offsets = [48, 0], sizes = [16, 96], strides = [1, 1]} : vector<128x96xf32> to vector<16x96xf32>
    %133 = vector.extract_strided_slice %132 {offsets = [0, 0], sizes = [16, 32], strides = [1, 1]} : vector<16x96xf32> to vector<16x32xf32>
    %134 = vector.extract_strided_slice %131 {offsets = [0, 0], sizes = [16, 32], strides = [1, 1]} : vector<16x96xf32> to vector<16x32xf32>
    %135 = arith.addf %133, %134 : vector<16x32xf32>
    %136 = arith.negf %135 : vector<16x32xf32>
    %137 = math.exp %136 : vector<16x32xf32>
    %cst_25 = arith.constant 1.000000e+00 : f32
    %138 = vector.broadcast %cst_25 : f32 to vector<16x32xf32>
    %139 = arith.addf %138, %137 : vector<16x32xf32>
    %140 = arith.divf %138, %139 : vector<16x32xf32>
    %141 = vector.extract_strided_slice %132 {offsets = [0, 32], sizes = [16, 32], strides = [1, 1]} : vector<16x96xf32> to vector<16x32xf32>
    %142 = vector.extract_strided_slice %131 {offsets = [0, 32], sizes = [16, 32], strides = [1, 1]} : vector<16x96xf32> to vector<16x32xf32>
    %143 = arith.addf %141, %142 : vector<16x32xf32>
    %144 = arith.negf %143 : vector<16x32xf32>
    %145 = math.exp %144 : vector<16x32xf32>
    %cst_26 = arith.constant 1.000000e+00 : f32
    %146 = vector.broadcast %cst_26 : f32 to vector<16x32xf32>
    %147 = arith.addf %146, %145 : vector<16x32xf32>
    %148 = arith.divf %146, %147 : vector<16x32xf32>
    %149 = vector.extract_strided_slice %132 {offsets = [0, 64], sizes = [16, 32], strides = [1, 1]} : vector<16x96xf32> to vector<16x32xf32>
    %150 = vector.extract_strided_slice %131 {offsets = [0, 64], sizes = [16, 32], strides = [1, 1]} : vector<16x96xf32> to vector<16x32xf32>
    %151 = vector.broadcast %12 : vector<1x32xf32> to vector<16x32xf32>
    %152 = arith.addf %150, %151 : vector<16x32xf32>
    %153 = arith.mulf %140, %152 : vector<16x32xf32>
    %154 = arith.addf %149, %153 : vector<16x32xf32>
    %155 = math.tanh %154 : vector<16x32xf32>
    %cst_27 = arith.constant 1.000000e+00 : f32
    %156 = vector.broadcast %cst_27 : f32 to vector<16x32xf32>
    %157 = arith.subf %156, %148 : vector<16x32xf32>
    %158 = arith.mulf %157, %155 : vector<16x32xf32>
    %159 = arith.mulf %148, %129 : vector<16x32xf32>
    %160 = arith.addf %158, %159 : vector<16x32xf32>
    %161 = vector.extract_strided_slice %20 {offsets = [3, 0, 0], sizes = [1, 16, 1], strides = [1, 1, 1]} : vector<8x16x1xi1> to vector<1x16x1xi1>
    %162 = vector.shape_cast %161 : vector<1x16x1xi1> to vector<16x1xi1>
    %163 = vector.shape_cast %162 : vector<16x1xi1> to vector<16x1xi1>
    %164 = vector.broadcast %163 : vector<16x1xi1> to vector<16x32xi1>
    %165 = arith.select %164, %160, %129 : vector<16x32xi1>, vector<16x32xf32>
    %166 = arith.truncf %165 : vector<16x32xf32> to vector<16x32xbf16>
    %cst_28 = arith.constant dense<0.000000e+00> : vector<16x96xf32>
    %167 = tpu.matmul %166, %11, %cst_28 {dimension_numbers = #tpu.dot_dimension_numbers<[1], [0], [0], [1], [0, 0, 1, 1], [], []>} : vector<16x32xbf16>, vector<32x96xbf16>, vector<16x96xf32> -> vector<16x96xf32>
    %168 = vector.extract_strided_slice %10 {offsets = [64, 0], sizes = [16, 96], strides = [1, 1]} : vector<128x96xf32> to vector<16x96xf32>
    %169 = vector.extract_strided_slice %168 {offsets = [0, 0], sizes = [16, 32], strides = [1, 1]} : vector<16x96xf32> to vector<16x32xf32>
    %170 = vector.extract_strided_slice %167 {offsets = [0, 0], sizes = [16, 32], strides = [1, 1]} : vector<16x96xf32> to vector<16x32xf32>
    %171 = arith.addf %169, %170 : vector<16x32xf32>
    %172 = arith.negf %171 : vector<16x32xf32>
    %173 = math.exp %172 : vector<16x32xf32>
    %cst_29 = arith.constant 1.000000e+00 : f32
    %174 = vector.broadcast %cst_29 : f32 to vector<16x32xf32>
    %175 = arith.addf %174, %173 : vector<16x32xf32>
    %176 = arith.divf %174, %175 : vector<16x32xf32>
    %177 = vector.extract_strided_slice %168 {offsets = [0, 32], sizes = [16, 32], strides = [1, 1]} : vector<16x96xf32> to vector<16x32xf32>
    %178 = vector.extract_strided_slice %167 {offsets = [0, 32], sizes = [16, 32], strides = [1, 1]} : vector<16x96xf32> to vector<16x32xf32>
    %179 = arith.addf %177, %178 : vector<16x32xf32>
    %180 = arith.negf %179 : vector<16x32xf32>
    %181 = math.exp %180 : vector<16x32xf32>
    %cst_30 = arith.constant 1.000000e+00 : f32
    %182 = vector.broadcast %cst_30 : f32 to vector<16x32xf32>
    %183 = arith.addf %182, %181 : vector<16x32xf32>
    %184 = arith.divf %182, %183 : vector<16x32xf32>
    %185 = vector.extract_strided_slice %168 {offsets = [0, 64], sizes = [16, 32], strides = [1, 1]} : vector<16x96xf32> to vector<16x32xf32>
    %186 = vector.extract_strided_slice %167 {offsets = [0, 64], sizes = [16, 32], strides = [1, 1]} : vector<16x96xf32> to vector<16x32xf32>
    %187 = vector.broadcast %12 : vector<1x32xf32> to vector<16x32xf32>
    %188 = arith.addf %186, %187 : vector<16x32xf32>
    %189 = arith.mulf %176, %188 : vector<16x32xf32>
    %190 = arith.addf %185, %189 : vector<16x32xf32>
    %191 = math.tanh %190 : vector<16x32xf32>
    %cst_31 = arith.constant 1.000000e+00 : f32
    %192 = vector.broadcast %cst_31 : f32 to vector<16x32xf32>
    %193 = arith.subf %192, %184 : vector<16x32xf32>
    %194 = arith.mulf %193, %191 : vector<16x32xf32>
    %195 = arith.mulf %184, %165 : vector<16x32xf32>
    %196 = arith.addf %194, %195 : vector<16x32xf32>
    %197 = vector.extract_strided_slice %20 {offsets = [4, 0, 0], sizes = [1, 16, 1], strides = [1, 1, 1]} : vector<8x16x1xi1> to vector<1x16x1xi1>
    %198 = vector.shape_cast %197 : vector<1x16x1xi1> to vector<16x1xi1>
    %199 = vector.shape_cast %198 : vector<16x1xi1> to vector<16x1xi1>
    %200 = vector.broadcast %199 : vector<16x1xi1> to vector<16x32xi1>
    %201 = arith.select %200, %196, %165 : vector<16x32xi1>, vector<16x32xf32>
    %202 = arith.truncf %201 : vector<16x32xf32> to vector<16x32xbf16>
    %cst_32 = arith.constant dense<0.000000e+00> : vector<16x96xf32>
    %203 = tpu.matmul %202, %11, %cst_32 {dimension_numbers = #tpu.dot_dimension_numbers<[1], [0], [0], [1], [0, 0, 1, 1], [], []>} : vector<16x32xbf16>, vector<32x96xbf16>, vector<16x96xf32> -> vector<16x96xf32>
    %204 = vector.extract_strided_slice %10 {offsets = [80, 0], sizes = [16, 96], strides = [1, 1]} : vector<128x96xf32> to vector<16x96xf32>
    %205 = vector.extract_strided_slice %204 {offsets = [0, 0], sizes = [16, 32], strides = [1, 1]} : vector<16x96xf32> to vector<16x32xf32>
    %206 = vector.extract_strided_slice %203 {offsets = [0, 0], sizes = [16, 32], strides = [1, 1]} : vector<16x96xf32> to vector<16x32xf32>
    %207 = arith.addf %205, %206 : vector<16x32xf32>
    %208 = arith.negf %207 : vector<16x32xf32>
    %209 = math.exp %208 : vector<16x32xf32>
    %cst_33 = arith.constant 1.000000e+00 : f32
    %210 = vector.broadcast %cst_33 : f32 to vector<16x32xf32>
    %211 = arith.addf %210, %209 : vector<16x32xf32>
    %212 = arith.divf %210, %211 : vector<16x32xf32>
    %213 = vector.extract_strided_slice %204 {offsets = [0, 32], sizes = [16, 32], strides = [1, 1]} : vector<16x96xf32> to vector<16x32xf32>
    %214 = vector.extract_strided_slice %203 {offsets = [0, 32], sizes = [16, 32], strides = [1, 1]} : vector<16x96xf32> to vector<16x32xf32>
    %215 = arith.addf %213, %214 : vector<16x32xf32>
    %216 = arith.negf %215 : vector<16x32xf32>
    %217 = math.exp %216 : vector<16x32xf32>
    %cst_34 = arith.constant 1.000000e+00 : f32
    %218 = vector.broadcast %cst_34 : f32 to vector<16x32xf32>
    %219 = arith.addf %218, %217 : vector<16x32xf32>
    %220 = arith.divf %218, %219 : vector<16x32xf32>
    %221 = vector.extract_strided_slice %204 {offsets = [0, 64], sizes = [16, 32], strides = [1, 1]} : vector<16x96xf32> to vector<16x32xf32>
    %222 = vector.extract_strided_slice %203 {offsets = [0, 64], sizes = [16, 32], strides = [1, 1]} : vector<16x96xf32> to vector<16x32xf32>
    %223 = vector.broadcast %12 : vector<1x32xf32> to vector<16x32xf32>
    %224 = arith.addf %222, %223 : vector<16x32xf32>
    %225 = arith.mulf %212, %224 : vector<16x32xf32>
    %226 = arith.addf %221, %225 : vector<16x32xf32>
    %227 = math.tanh %226 : vector<16x32xf32>
    %cst_35 = arith.constant 1.000000e+00 : f32
    %228 = vector.broadcast %cst_35 : f32 to vector<16x32xf32>
    %229 = arith.subf %228, %220 : vector<16x32xf32>
    %230 = arith.mulf %229, %227 : vector<16x32xf32>
    %231 = arith.mulf %220, %201 : vector<16x32xf32>
    %232 = arith.addf %230, %231 : vector<16x32xf32>
    %233 = vector.extract_strided_slice %20 {offsets = [5, 0, 0], sizes = [1, 16, 1], strides = [1, 1, 1]} : vector<8x16x1xi1> to vector<1x16x1xi1>
    %234 = vector.shape_cast %233 : vector<1x16x1xi1> to vector<16x1xi1>
    %235 = vector.shape_cast %234 : vector<16x1xi1> to vector<16x1xi1>
    %236 = vector.broadcast %235 : vector<16x1xi1> to vector<16x32xi1>
    %237 = arith.select %236, %232, %201 : vector<16x32xi1>, vector<16x32xf32>
    %238 = arith.truncf %237 : vector<16x32xf32> to vector<16x32xbf16>
    %cst_36 = arith.constant dense<0.000000e+00> : vector<16x96xf32>
    %239 = tpu.matmul %238, %11, %cst_36 {dimension_numbers = #tpu.dot_dimension_numbers<[1], [0], [0], [1], [0, 0, 1, 1], [], []>} : vector<16x32xbf16>, vector<32x96xbf16>, vector<16x96xf32> -> vector<16x96xf32>
    %240 = vector.extract_strided_slice %10 {offsets = [96, 0], sizes = [16, 96], strides = [1, 1]} : vector<128x96xf32> to vector<16x96xf32>
    %241 = vector.extract_strided_slice %240 {offsets = [0, 0], sizes = [16, 32], strides = [1, 1]} : vector<16x96xf32> to vector<16x32xf32>
    %242 = vector.extract_strided_slice %239 {offsets = [0, 0], sizes = [16, 32], strides = [1, 1]} : vector<16x96xf32> to vector<16x32xf32>
    %243 = arith.addf %241, %242 : vector<16x32xf32>
    %244 = arith.negf %243 : vector<16x32xf32>
    %245 = math.exp %244 : vector<16x32xf32>
    %cst_37 = arith.constant 1.000000e+00 : f32
    %246 = vector.broadcast %cst_37 : f32 to vector<16x32xf32>
    %247 = arith.addf %246, %245 : vector<16x32xf32>
    %248 = arith.divf %246, %247 : vector<16x32xf32>
    %249 = vector.extract_strided_slice %240 {offsets = [0, 32], sizes = [16, 32], strides = [1, 1]} : vector<16x96xf32> to vector<16x32xf32>
    %250 = vector.extract_strided_slice %239 {offsets = [0, 32], sizes = [16, 32], strides = [1, 1]} : vector<16x96xf32> to vector<16x32xf32>
    %251 = arith.addf %249, %250 : vector<16x32xf32>
    %252 = arith.negf %251 : vector<16x32xf32>
    %253 = math.exp %252 : vector<16x32xf32>
    %cst_38 = arith.constant 1.000000e+00 : f32
    %254 = vector.broadcast %cst_38 : f32 to vector<16x32xf32>
    %255 = arith.addf %254, %253 : vector<16x32xf32>
    %256 = arith.divf %254, %255 : vector<16x32xf32>
    %257 = vector.extract_strided_slice %240 {offsets = [0, 64], sizes = [16, 32], strides = [1, 1]} : vector<16x96xf32> to vector<16x32xf32>
    %258 = vector.extract_strided_slice %239 {offsets = [0, 64], sizes = [16, 32], strides = [1, 1]} : vector<16x96xf32> to vector<16x32xf32>
    %259 = vector.broadcast %12 : vector<1x32xf32> to vector<16x32xf32>
    %260 = arith.addf %258, %259 : vector<16x32xf32>
    %261 = arith.mulf %248, %260 : vector<16x32xf32>
    %262 = arith.addf %257, %261 : vector<16x32xf32>
    %263 = math.tanh %262 : vector<16x32xf32>
    %cst_39 = arith.constant 1.000000e+00 : f32
    %264 = vector.broadcast %cst_39 : f32 to vector<16x32xf32>
    %265 = arith.subf %264, %256 : vector<16x32xf32>
    %266 = arith.mulf %265, %263 : vector<16x32xf32>
    %267 = arith.mulf %256, %237 : vector<16x32xf32>
    %268 = arith.addf %266, %267 : vector<16x32xf32>
    %269 = vector.extract_strided_slice %20 {offsets = [6, 0, 0], sizes = [1, 16, 1], strides = [1, 1, 1]} : vector<8x16x1xi1> to vector<1x16x1xi1>
    %270 = vector.shape_cast %269 : vector<1x16x1xi1> to vector<16x1xi1>
    %271 = vector.shape_cast %270 : vector<16x1xi1> to vector<16x1xi1>
    %272 = vector.broadcast %271 : vector<16x1xi1> to vector<16x32xi1>
    %273 = arith.select %272, %268, %237 : vector<16x32xi1>, vector<16x32xf32>
    %274 = arith.truncf %273 : vector<16x32xf32> to vector<16x32xbf16>
    %cst_40 = arith.constant dense<0.000000e+00> : vector<16x96xf32>
    %275 = tpu.matmul %274, %11, %cst_40 {dimension_numbers = #tpu.dot_dimension_numbers<[1], [0], [0], [1], [0, 0, 1, 1], [], []>} : vector<16x32xbf16>, vector<32x96xbf16>, vector<16x96xf32> -> vector<16x96xf32>
    %276 = vector.extract_strided_slice %10 {offsets = [112, 0], sizes = [16, 96], strides = [1, 1]} : vector<128x96xf32> to vector<16x96xf32>
    %277 = vector.extract_strided_slice %276 {offsets = [0, 0], sizes = [16, 32], strides = [1, 1]} : vector<16x96xf32> to vector<16x32xf32>
    %278 = vector.extract_strided_slice %275 {offsets = [0, 0], sizes = [16, 32], strides = [1, 1]} : vector<16x96xf32> to vector<16x32xf32>
    %279 = arith.addf %277, %278 : vector<16x32xf32>
    %280 = arith.negf %279 : vector<16x32xf32>
    %281 = math.exp %280 : vector<16x32xf32>
    %cst_41 = arith.constant 1.000000e+00 : f32
    %282 = vector.broadcast %cst_41 : f32 to vector<16x32xf32>
    %283 = arith.addf %282, %281 : vector<16x32xf32>
    %284 = arith.divf %282, %283 : vector<16x32xf32>
    %285 = vector.extract_strided_slice %276 {offsets = [0, 32], sizes = [16, 32], strides = [1, 1]} : vector<16x96xf32> to vector<16x32xf32>
    %286 = vector.extract_strided_slice %275 {offsets = [0, 32], sizes = [16, 32], strides = [1, 1]} : vector<16x96xf32> to vector<16x32xf32>
    %287 = arith.addf %285, %286 : vector<16x32xf32>
    %288 = arith.negf %287 : vector<16x32xf32>
    %289 = math.exp %288 : vector<16x32xf32>
    %cst_42 = arith.constant 1.000000e+00 : f32
    %290 = vector.broadcast %cst_42 : f32 to vector<16x32xf32>
    %291 = arith.addf %290, %289 : vector<16x32xf32>
    %292 = arith.divf %290, %291 : vector<16x32xf32>
    %293 = vector.extract_strided_slice %276 {offsets = [0, 64], sizes = [16, 32], strides = [1, 1]} : vector<16x96xf32> to vector<16x32xf32>
    %294 = vector.extract_strided_slice %275 {offsets = [0, 64], sizes = [16, 32], strides = [1, 1]} : vector<16x96xf32> to vector<16x32xf32>
    %295 = vector.broadcast %12 : vector<1x32xf32> to vector<16x32xf32>
    %296 = arith.addf %294, %295 : vector<16x32xf32>
    %297 = arith.mulf %284, %296 : vector<16x32xf32>
    %298 = arith.addf %293, %297 : vector<16x32xf32>
    %299 = math.tanh %298 : vector<16x32xf32>
    %cst_43 = arith.constant 1.000000e+00 : f32
    %300 = vector.broadcast %cst_43 : f32 to vector<16x32xf32>
    %301 = arith.subf %300, %292 : vector<16x32xf32>
    %302 = arith.mulf %301, %299 : vector<16x32xf32>
    %303 = arith.mulf %292, %273 : vector<16x32xf32>
    %304 = arith.addf %302, %303 : vector<16x32xf32>
    %305 = vector.extract_strided_slice %20 {offsets = [7, 0, 0], sizes = [1, 16, 1], strides = [1, 1, 1]} : vector<8x16x1xi1> to vector<1x16x1xi1>
    %306 = vector.shape_cast %305 : vector<1x16x1xi1> to vector<16x1xi1>
    %307 = vector.shape_cast %306 : vector<16x1xi1> to vector<16x1xi1>
    %308 = vector.broadcast %307 : vector<16x1xi1> to vector<16x32xi1>
    %309 = arith.select %308, %304, %273 : vector<16x32xi1>, vector<16x32xf32>
    %c0_44 = arith.constant 0 : index
    %c0_45 = arith.constant 0 : index
    %310 = vector.load %arg10[%c0_44, %c0_45] : memref<16x32xf32, #tpu.memory_space<vmem>>, vector<16x32xf32>
    tpu.vector_store %arg10[%c0_44, %c0_45], %309 {strides = array<i32>} : memref<16x32xf32, #tpu.memory_space<vmem>>, vector<16x32xf32>,
    %c0_i32_46 = arith.constant 0 : i32
    %311 = arith.cmpi eq, %arg0, %c0_i32_46 : i32
    %312 = arith.extui %311 : i1 to i32
    %c0_i32_47 = arith.constant 0 : i32
    %313 = arith.cmpi ne, %312, %c0_i32_47 : i32
    scf.if %313 {
      %314 = arith.truncf %309 : vector<16x32xf32> to vector<16x32xbf16>
      %c0_48 = arith.constant 0 : index
      %c0_49 = arith.constant 0 : index
      %315 = vector.load %arg6[%c0_48, %c0_49] : memref<32x4xbf16, #tpu.memory_space<vmem>>, vector<32x4xbf16>
      %cst_50 = arith.constant dense<0.000000e+00> : vector<16x4xf32>
      %316 = tpu.matmul %314, %315, %cst_50 {dimension_numbers = #tpu.dot_dimension_numbers<[1], [0], [0], [1], [0, 0, 1, 1], [], []>} : vector<16x32xbf16>, vector<32x4xbf16>, vector<16x4xf32> -> vector<16x4xf32>
      %c0_51 = arith.constant 0 : index
      %c0_52 = arith.constant 0 : index
      %317 = vector.load %arg7[%c0_51, %c0_52] : memref<1x4xf32, #tpu.memory_space<vmem>>, vector<1x4xf32>
      %318 = vector.broadcast %317 : vector<1x4xf32> to vector<16x4xf32>
      %319 = arith.addf %316, %318 : vector<16x4xf32>
      %c0_53 = arith.constant 0 : index
      %c0_54 = arith.constant 0 : index
      %320 = vector.load %arg8[%c0_53, %c0_54] : memref<16x4xf32, #tpu.memory_space<vmem>>, vector<16x4xf32>
      tpu.vector_store %arg8[%c0_53, %c0_54], %319 {strides = array<i32>} : memref<16x4xf32, #tpu.memory_space<vmem>>, vector<16x4xf32>,
      %321 = tpu.iota {dimensions = array<i32: 1>} : vector<16x4xi32>
      %cst_55 = arith.constant dense<0xFF800000> : vector<16xf32>
      %322 = vector.multi_reduction <maximumf>, %319, %cst_55 [1] : vector<16x4xf32> to vector<16xf32>
      %323 = vector.shape_cast %322 : vector<16xf32> to vector<16x1xf32>
      %324 = vector.broadcast %323 : vector<16x1xf32> to vector<16x4xf32>
      %325 = arith.cmpf oeq, %319, %324 : vector<16x4xf32>
      %c4_i32 = arith.constant 4 : i32
      %326 = vector.broadcast %c4_i32 : i32 to vector<16x4xi32>
      %327 = arith.select %325, %321, %326 : vector<16x4xi1>, vector<16x4xi32>
      %cst_56 = arith.constant dense<2147483647> : vector<16xi32>
      %328 = vector.multi_reduction <minsi>, %327, %cst_56 [1] : vector<16x4xi32> to vector<16xi32>
      %329 = vector.shape_cast %328 : vector<16xi32> to vector<16x1xi32>
      %c0_57 = arith.constant 0 : index
      %c0_58 = arith.constant 0 : index
      %330 = vector.load %arg9[%c0_57, %c0_58] : memref<16x1xi32, #tpu.memory_space<vmem>>, vector<16x1xi32>
      tpu.vector_store %arg9[%c0_57, %c0_58], %329 {strides = array<i32>} : memref<16x1xi32, #tpu.memory_space<vmem>>, vector<16x1xi32>,
    } else {
    }
    return
  }
  func.func @transform_0(%arg0: i32) -> (i32, i32) {
    %c0_i32 = arith.constant 0 : i32
    %c0_i32_0 = arith.constant 0 : i32
    return %arg0, %c0_i32 : i32, i32
  }
  func.func @transform_1(%arg0: i32) -> (i32, i32) {
    %c0_i32 = arith.constant 0 : i32
    %c0_i32_0 = arith.constant 0 : i32
    %c0_i32_1 = arith.constant 0 : i32
    return %c0_i32, %c0_i32_0 : i32, i32
  }
  func.func @transform_2(%arg0: i32) -> (i32, i32) {
    %c0_i32 = arith.constant 0 : i32
    %c0_i32_0 = arith.constant 0 : i32
    %c0_i32_1 = arith.constant 0 : i32
    return %c0_i32, %c0_i32_0 : i32, i32
  }
  func.func @transform_3(%arg0: i32) -> (i32, i32) {
    %c0_i32 = arith.constant 0 : i32
    %c0_i32_0 = arith.constant 0 : i32
    %c0_i32_1 = arith.constant 0 : i32
    return %c0_i32, %c0_i32_0 : i32, i32
  }
  func.func @transform_4(%arg0: i32) -> (i32, i32) {
    %c0_i32 = arith.constant 0 : i32
    %c0_i32_0 = arith.constant 0 : i32
    %c0_i32_1 = arith.constant 0 : i32
    return %c0_i32, %c0_i32_0 : i32, i32
  }
  func.func @transform_5(%arg0: i32) -> (i32, i32) {
    %c0_i32 = arith.constant 0 : i32
    %c0_i32_0 = arith.constant 0 : i32
    %c0_i32_1 = arith.constant 0 : i32
    return %c0_i32, %c0_i32_0 : i32, i32
  }
  func.func @transform_6(%arg0: i32) -> (i32, i32) {
    %c0_i32 = arith.constant 0 : i32
    %c0_i32_0 = arith.constant 0 : i32
    %c0_i32_1 = arith.constant 0 : i32
    return %c0_i32, %c0_i32_0 : i32, i32
  }
  func.func @transform_7(%arg0: i32) -> (i32, i32) {
    %c0_i32 = arith.constant 0 : i32
    %c0_i32_0 = arith.constant 0 : i32
    %c0_i32_1 = arith.constant 0 : i32
    return %c0_i32, %c0_i32_0 : i32, i32
  }
  func.func @transform_8(%arg0: i32) -> (i32, i32) {
    %c0_i32 = arith.constant 0 : i32
    %c0_i32_0 = arith.constant 0 : i32
    %c0_i32_1 = arith.constant 0 : i32
    return %c0_i32, %c0_i32_0 : i32, i32
  }
}

</mosaic_0001>

<llo_original>
// kernel: tpu_custom_call.1
$region0: #{tpu_custom_call.1}
  #allocation0 [shape = 'u32[]', space=smem, size = 0x4, offset = 0x4, fixed_abs, tag = 'smem constant byte address 0x4 - core index']
  #allocation1 [shape = 'u32[144,128]{1,0:T(1,128)}', space=vmem, size = 0x12000, scoped, tag = 'internal scratch']
  #allocation2 [shape = 'f32[16,32]{1,0:T(8,128)}', space=vmem, size = 0x2000, scoped, tag = 'scratch operand']
  %s0 = inlined_call_operand.vmem [shape: s32[128,1], index: 0, kind: input, shape index: {}]
  %s1 = inlined_call_operand.vmem [shape: s32[16,1], index: 1, kind: input, shape index: {}]
  %s2 = inlined_call_operand.vmem [shape: f32[128,96], index: 2, kind: input, shape index: {}]
  %s3 = inlined_call_operand.vmem [shape: bf16[32,96], index: 3, kind: input, shape index: {}]
  %s4 = inlined_call_operand.vmem [shape: f32[1,32], index: 4, kind: input, shape index: {}]
  %s5 = inlined_call_operand.vmem [shape: bf16[32,4], index: 5, kind: input, shape index: {}]
  %s6 = inlined_call_operand.vmem [shape: f32[1,4], index: 6, kind: input, shape index: {}]
  %s7 = inlined_call_operand.vmem [shape: f32[16,4], index: 7, kind: output, shape index: {0}]
  %s8 = inlined_call_operand.vmem [shape: s32[16,1], index: 8, kind: output, shape index: {1}]
  %9 = xla_tuple %s7, %s8
  %s10 = sld [smem:[#allocation0]]
  $region54: #{tpu_custom_call.1} parent=0
    _
  %s12 = ssub.s32 1, %s10
  %s13 = scalar_select 0, %s12, %s10
  // Predicated region
  $region2: #{tpu_custom_call.1} parent=0 // pred_check
    _
  $region3: #{tpu_custom_call.1} parent=0 // pred_check_branch
    %15 = sbr.rel (0) target = $region5
  $region4: #{tpu_custom_call.1} parent=0 // pred_region
    _
  $region5: #{tpu_custom_call.1} parent=0 // pred_fallthru
    _
  // Predicated region
  $region6: #{tpu_custom_call.1} parent=0 // pred_check
    _
  $region7: #{tpu_custom_call.1} parent=0 // pred_check_branch
    %17 = sbr.rel (0) target = $region9
  $region8: #{tpu_custom_call.1} parent=0 // pred_region
    _
  $region9: #{tpu_custom_call.1} parent=0 // pred_fallthru
    _
  // Predicated region
  $region10: #{tpu_custom_call.1} parent=0 // pred_check
    _
  $region11: #{tpu_custom_call.1} parent=0 // pred_check_branch
    %19 = sbr.rel (0) target = $region13
  $region12: #{tpu_custom_call.1} parent=0 // pred_region
    _
  $region13: #{tpu_custom_call.1} parent=0 // pred_fallthru
    _
  // Predicated region
  $region14: #{tpu_custom_call.1} parent=0 // pred_check
    _
  $region15: #{tpu_custom_call.1} parent=0 // pred_check_branch
    %21 = sbr.rel (0) target = $region17
  $region16: #{tpu_custom_call.1} parent=0 // pred_region
    _
  $region17: #{tpu_custom_call.1} parent=0 // pred_fallthru
    _
  // Predicated region
  $region18: #{tpu_custom_call.1} parent=0 // pred_check
    _
  $region19: #{tpu_custom_call.1} parent=0 // pred_check_branch
    %23 = sbr.rel (0) target = $region21
  $region20: #{tpu_custom_call.1} parent=0 // pred_region
    _
  $region21: #{tpu_custom_call.1} parent=0 // pred_fallthru
    _
  // Predicated region
  $region22: #{tpu_custom_call.1} parent=0 // pred_check
    _
  $region23: #{tpu_custom_call.1} parent=0 // pred_check_branch
    %25 = sbr.rel (0) target = $region25
  $region24: #{tpu_custom_call.1} parent=0 // pred_region
    _
  $region25: #{tpu_custom_call.1} parent=0 // pred_fallthru
    _
  // Predicated region
  $region26: #{tpu_custom_call.1} parent=0 // pred_check
    _
  $region27: #{tpu_custom_call.1} parent=0 // pred_check_branch
    %27 = sbr.rel (0) target = $region29
  $region28: #{tpu_custom_call.1} parent=0 // pred_region
    _
  $region29: #{tpu_custom_call.1} parent=0 // pred_fallthru
    _
  %p29 = scmp.eq.s32.totalorder 0, 0
  // Predicated region
  $region30: #{tpu_custom_call.1} parent=0 // pred_check
    %p30 = pneg %p29
  $region31: #{tpu_custom_call.1} parent=0 // pred_check_branch
    %32 = sbr.rel (%p30) target = $region33
  $region32: #{tpu_custom_call.1} parent=0 // pred_region
    %vm33 = vcmask 261120
    %34 = vst.msk [vmem:[#allocation2] sm:$0xff] %vm33, 0.0
    %35 = vst.msk [vmem:[#allocation2 + $0x8] sm:$0xff] %vm33, 0.0
  $region33: #{tpu_custom_call.1} parent=0 // pred_fallthru
    _
  %v36 = vld [vmem:[%s0] sm:$0xff]
  %v37 = vld [vmem:[%s0 + $0x8] sm:$0xff]
  %v38 = vld [vmem:[%s0 + $0x10] sm:$0xff]
  %v39 = vld [vmem:[%s0 + $0x18] sm:$0xff]
  %v40 = vld [vmem:[%s0 + $0x20] sm:$0xff]
  %v41 = vld [vmem:[%s0 + $0x28] sm:$0xff]
  %v42 = vld [vmem:[%s0 + $0x30] sm:$0xff]
  %v43 = vld [vmem:[%s0 + $0x38] sm:$0xff]
  %v44 = vld [vmem:[%s0 + $0x40] sm:$0xff]
  %v45 = vld [vmem:[%s0 + $0x48] sm:$0xff]
  %v46 = vld [vmem:[%s0 + $0x50] sm:$0xff]
  %v47 = vld [vmem:[%s0 + $0x58] sm:$0xff]
  %v48 = vld [vmem:[%s0 + $0x60] sm:$0xff]
  %v49 = vld [vmem:[%s0 + $0x68] sm:$0xff]
  %v50 = vld [vmem:[%s0 + $0x70] sm:$0xff]
  %v51 = vld [vmem:[%s0 + $0x78] sm:$0xff]
  %v52 = vlaneseq
  %v53 = vand.u32 %v52, 127
  %54 = vset.pattern.permute.xlu0 0
  %55 = vperm.xlu0 %54, %v36
  %v56 = vpop.permute.xlu0 %55
  %57 = vset.pattern.permute.xlu0 0
  %58 = vperm.xlu0 %57, %v37
  %v59 = vpop.permute.xlu0 %58
  %60 = vset.pattern.permute.xlu0 0
  %61 = vperm.xlu0 %60, %v38
  %v62 = vpop.permute.xlu0 %61
  %63 = vset.pattern.permute.xlu0 0
  %64 = vperm.xlu0 %63, %v39
  %v65 = vpop.permute.xlu0 %64
  %66 = vset.pattern.permute.xlu0 0
  %67 = vperm.xlu0 %66, %v40
  %v68 = vpop.permute.xlu0 %67
  %69 = vset.pattern.permute.xlu0 0
  %70 = vperm.xlu0 %69, %v41
  %v71 = vpop.permute.xlu0 %70
  %72 = vset.pattern.permute.xlu0 0
  %73 = vperm.xlu0 %72, %v42
  %v74 = vpop.permute.xlu0 %73
  %75 = vset.pattern.permute.xlu0 0
  %76 = vperm.xlu0 %75, %v43
  %v77 = vpop.permute.xlu0 %76
  %78 = vset.pattern.permute.xlu0 0
  %79 = vperm.xlu0 %78, %v44
  %v80 = vpop.permute.xlu0 %79
  %81 = vset.pattern.permute.xlu0 0
  %82 = vperm.xlu0 %81, %v45
  %v83 = vpop.permute.xlu0 %82
  %84 = vset.pattern.permute.xlu0 0
  %85 = vperm.xlu0 %84, %v46
  %v86 = vpop.permute.xlu0 %85
  %87 = vset.pattern.permute.xlu0 0
  %88 = vperm.xlu0 %87, %v47
  %v89 = vpop.permute.xlu0 %88
  %90 = vset.pattern.permute.xlu0 0
  %91 = vperm.xlu0 %90, %v48
  %v92 = vpop.permute.xlu0 %91
  %93 = vset.pattern.permute.xlu0 0
  %94 = vperm.xlu0 %93, %v49
  %v95 = vpop.permute.xlu0 %94
  %96 = vset.pattern.permute.xlu0 0
  %97 = vperm.xlu0 %96, %v50
  %v98 = vpop.permute.xlu0 %97
  %99 = vset.pattern.permute.xlu0 0
  %100 = vperm.xlu0 %99, %v51
  %v101 = vpop.permute.xlu0 %100
  %vm102 = vcmp.eq.s32.totalorder %v56, %v53
  %vm103 = vcmp.eq.s32.totalorder %v59, %v53
  %vm104 = vcmp.eq.s32.totalorder %v62, %v53
  %vm105 = vcmp.eq.s32.totalorder %v65, %v53
  %vm106 = vcmp.eq.s32.totalorder %v68, %v53
  %vm107 = vcmp.eq.s32.totalorder %v71, %v53
  %vm108 = vcmp.eq.s32.totalorder %v74, %v53
  %vm109 = vcmp.eq.s32.totalorder %v77, %v53
  %vm110 = vcmp.eq.s32.totalorder %v80, %v53
  %vm111 = vcmp.eq.s32.totalorder %v83, %v53
  %vm112 = vcmp.eq.s32.totalorder %v86, %v53
  %vm113 = vcmp.eq.s32.totalorder %v89, %v53
  %vm114 = vcmp.eq.s32.totalorder %v92, %v53
  %vm115 = vcmp.eq.s32.totalorder %v95, %v53
  %vm116 = vcmp.eq.s32.totalorder %v98, %v53
  %vm117 = vcmp.eq.s32.totalorder %v101, %v53
  %v118 = vsel %vm102, 1, 0
  %v119 = vsel %vm103, 1, 0
  %v120 = vsel %vm104, 1, 0
  %v121 = vsel %vm105, 1, 0
  %v122 = vsel %vm106, 1, 0
  %v123 = vsel %vm107, 1, 0
  %v124 = vsel %vm108, 1, 0
  %v125 = vsel %vm109, 1, 0
  %v126 = vsel %vm110, 1, 0
  %v127 = vsel %vm111, 1, 0
  %v128 = vsel %vm112, 1, 0
  %v129 = vsel %vm113, 1, 0
  %v130 = vsel %vm114, 1, 0
  %v131 = vsel %vm115, 1, 0
  %v132 = vsel %vm116, 1, 0
  %v133 = vsel %vm117, 1, 0
  %v134 = vcvt.s32.f32 %v118
  %v135 = vcvt.s32.f32 %v119
  %v136 = vcvt.s32.f32 %v120
  %v137 = vcvt.s32.f32 %v121
  %v138 = vcvt.s32.f32 %v122
  %v139 = vcvt.s32.f32 %v123
  %v140 = vcvt.s32.f32 %v124
  %v141 = vcvt.s32.f32 %v125
  %v142 = vcvt.s32.f32 %v126
  %v143 = vcvt.s32.f32 %v127
  %v144 = vcvt.s32.f32 %v128
  %v145 = vcvt.s32.f32 %v129
  %v146 = vcvt.s32.f32 %v130
  %v147 = vcvt.s32.f32 %v131
  %v148 = vcvt.s32.f32 %v132
  %v149 = vcvt.s32.f32 %v133
  %v150 = vld [vmem:[%s2] sm:$0xff]
  %v151 = vld [vmem:[%s2 + $0x8] sm:$0xff]
  %v152 = vld [vmem:[%s2 + $0x10] sm:$0xff]
  %v153 = vld [vmem:[%s2 + $0x18] sm:$0xff]
  %v154 = vld [vmem:[%s2 + $0x20] sm:$0xff]
  %v155 = vld [vmem:[%s2 + $0x28] sm:$0xff]
  %v156 = vld [vmem:[%s2 + $0x30] sm:$0xff]
  %v157 = vld [vmem:[%s2 + $0x38] sm:$0xff]
  %v158 = vld [vmem:[%s2 + $0x40] sm:$0xff]
  %v159 = vld [vmem:[%s2 + $0x48] sm:$0xff]
  %v160 = vld [vmem:[%s2 + $0x50] sm:$0xff]
  %v161 = vld [vmem:[%s2 + $0x58] sm:$0xff]
  %v162 = vld [vmem:[%s2 + $0x60] sm:$0xff]
  %v163 = vld [vmem:[%s2 + $0x68] sm:$0xff]
  %v164 = vld [vmem:[%s2 + $0x70] sm:$0xff]
  %v165 = vld [vmem:[%s2 + $0x78] sm:$0xff]
  %166 = vmatprep.subr.mxu0 0.0
  %167 = vmatpush1.msra.mxu0 %v150
  %168 = vmatprep.subr.mxu0 0.0
  %169 = vmatpush1.msra.mxu0 %v151
  %170 = vmatprep.subr.mxu0 0.0
  %171 = vmatpush1.msra.mxu0 %v152
  %172 = vmatprep.subr.mxu0 0.0
  %173 = vmatpush1.msra.mxu0 %v153
  %174 = vmatprep.subr.mxu0 0.0
  %175 = vmatpush1.msra.mxu0 %v154
  %176 = vmatprep.subr.mxu0 0.0
  %177 = vmatpush1.msra.mxu0 %v155
  %178 = vmatprep.subr.mxu0 0.0
  %179 = vmatpush1.msra.mxu0 %v156
  %180 = vmatprep.subr.mxu0 0.0
  %181 = vmatpush1.msra.mxu0 %v157
  %182 = vmatprep.subr.mxu0 0.0
  %183 = vmatpush1.msra.mxu0 %v158
  %184 = vmatprep.subr.mxu0 0.0
  %185 = vmatpush1.msra.mxu0 %v159
  %186 = vmatprep.subr.mxu0 0.0
  %187 = vmatpush1.msra.mxu0 %v160
  %188 = vmatprep.subr.mxu0 0.0
  %189 = vmatpush1.msra.mxu0 %v161
  %190 = vmatprep.subr.mxu0 0.0
  %191 = vmatpush1.msra.mxu0 %v162
  %192 = vmatprep.subr.mxu0 0.0
  %193 = vmatpush1.msra.mxu0 %v163
  %194 = vmatprep.subr.mxu0 0.0
  %195 = vmatpush1.msra.mxu0 %v164
  %196 = vmatprep.subr.mxu0 0.0
  %197 = vmatpush1.msra.mxu0 %v165
  %198 = vmatprep.subr.mxu0 0.0
  %199 = vmatpush1.msra.mxu0 0.0
  %200 = vmatprep.subr.mxu0 0.0
  %201 = vmatpush1.msra.mxu0 0.0
  %202 = vmatprep.subr.mxu0 0.0
  %203 = vmatpush1.msra.mxu0 0.0
  %204 = vmatprep.subr.mxu0 0.0
  %205 = vmatpush1.msra.mxu0 0.0
  %206 = vmatprep.subr.mxu0 0.0
  %207 = vmatpush1.msra.mxu0 0.0
  %208 = vmatprep.subr.mxu0 0.0
  %209 = vmatpush1.msra.mxu0 0.0
  %210 = vmatprep.subr.mxu0 0.0
  %211 = vmatpush1.msra.mxu0 0.0
  %212 = vmatprep.subr.mxu0 0.0
  %213 = vmatpush1.msra.mxu0 0.0
  %214 = vmatprep.subr.mxu0 0.0
  %215 = vmatpush1.msra.mxu0 0.0
  %216 = vmatprep.subr.mxu0 0.0
  %217 = vmatpush1.msra.mxu0 0.0
  %218 = vmatprep.subr.mxu0 0.0
  %219 = vmatpush1.msra.mxu0 0.0
  %220 = vmatprep.subr.mxu0 0.0
  %221 = vmatpush1.msra.mxu0 0.0
  %222 = vmatprep.subr.mxu0 0.0
  %223 = vmatpush1.msra.mxu0 0.0
  %224 = vmatprep.subr.mxu0 0.0
  %225 = vmatpush1.msra.mxu0 0.0
  %226 = vmatprep.subr.mxu0 0.0
  %227 = vmatpush1.msra.mxu0 0.0
  %228 = vmatprep.subr.mxu0 0.0
  %229 = vmatpush1.msra.mxu0 0.0
  %230 = vmatprep.mubr.f32.mxu0 0.0
  %231 = vmatmul.mubr.f32.gmra.mrb[0].mxu0 %v134
  %v232 = vpop.f32.mrb[0].mxu0
  %v233 = vadd.f32 0.0, %v232
  %v234 = vpop.f32.mrb[0].mxu0
  %235 = vmatprep.mubr.f32.mxu0 0.0
  %236 = vmatmul.mubr.f32.gmra.mrb[0].mxu0 %v135
  %v237 = vpop.f32.mrb[0].mxu0
  %v238 = vadd.f32 0.0, %v237
  %v239 = vpop.f32.mrb[0].mxu0
  %240 = vmatprep.mubr.f32.mxu0 0.0
  %241 = vmatmul.mubr.f32.gmra.mrb[0].mxu0 %v136
  %v242 = vpop.f32.mrb[0].mxu0
  %v243 = vadd.f32 0.0, %v242
  %v244 = vpop.f32.mrb[0].mxu0
  %245 = vmatprep.mubr.f32.mxu0 0.0
  %246 = vmatmul.mubr.f32.gmra.mrb[0].mxu0 %v137
  %v247 = vpop.f32.mrb[0].mxu0
  %v248 = vadd.f32 0.0, %v247
  %v249 = vpop.f32.mrb[0].mxu0
  %250 = vmatprep.mubr.f32.mxu0 0.0
  %251 = vmatmul.mubr.f32.gmra.mrb[0].mxu0 %v138
  %v252 = vpop.f32.mrb[0].mxu0
  %v253 = vadd.f32 0.0, %v252
  %v254 = vpop.f32.mrb[0].mxu0
  %255 = vmatprep.mubr.f32.mxu0 0.0
  %256 = vmatmul.mubr.f32.gmra.mrb[0].mxu0 %v139
  %v257 = vpop.f32.mrb[0].mxu0
  %v258 = vadd.f32 0.0, %v257
  %v259 = vpop.f32.mrb[0].mxu0
  %260 = vmatprep.mubr.f32.mxu0 0.0
  %261 = vmatmul.mubr.f32.gmra.mrb[0].mxu0 %v140
  %v262 = vpop.f32.mrb[0].mxu0
  %v263 = vadd.f32 0.0, %v262
  %v264 = vpop.f32.mrb[0].mxu0
  %265 = vmatprep.mubr.f32.mxu0 0.0
  %266 = vmatmul.mubr.f32.gmra.mrb[0].mxu0 %v141
  %v267 = vpop.f32.mrb[0].mxu0
  %v268 = vadd.f32 0.0, %v267
  %v269 = vpop.f32.mrb[0].mxu0
  %270 = vmatprep.mubr.f32.mxu0 0.0
  %271 = vmatmul.mubr.f32.gmra.mrb[0].mxu0 %v142
  %v272 = vpop.f32.mrb[0].mxu0
  %v273 = vadd.f32 0.0, %v272
  %v274 = vpop.f32.mrb[0].mxu0
  %275 = vmatprep.mubr.f32.mxu0 0.0
  %276 = vmatmul.mubr.f32.gmra.mrb[0].mxu0 %v143
  %v277 = vpop.f32.mrb[0].mxu0
  %v278 = vadd.f32 0.0, %v277
  %v279 = vpop.f32.mrb[0].mxu0
  %280 = vmatprep.mubr.f32.mxu0 0.0
  %281 = vmatmul.mubr.f32.gmra.mrb[0].mxu0 %v144
  %v282 = vpop.f32.mrb[0].mxu0
  %v283 = vadd.f32 0.0, %v282
  %v284 = vpop.f32.mrb[0].mxu0
  %285 = vmatprep.mubr.f32.mxu0 0.0
  %286 = vmatmul.mubr.f32.gmra.mrb[0].mxu0 %v145
  %v287 = vpop.f32.mrb[0].mxu0
  %v288 = vadd.f32 0.0, %v287
  %v289 = vpop.f32.mrb[0].mxu0
  %290 = vmatprep.mubr.f32.mxu0 0.0
  %291 = vmatmul.mubr.f32.gmra.mrb[0].mxu0 %v146
  %v292 = vpop.f32.mrb[0].mxu0
  %v293 = vadd.f32 0.0, %v292
  %v294 = vpop.f32.mrb[0].mxu0
  %295 = vmatprep.mubr.f32.mxu0 0.0
  %296 = vmatmul.mubr.f32.gmra.mrb[0].mxu0 %v147
  %v297 = vpop.f32.mrb[0].mxu0
  %v298 = vadd.f32 0.0, %v297
  %v299 = vpop.f32.mrb[0].mxu0
  %300 = vmatprep.mubr.f32.mxu0 0.0
  %301 = vmatmul.mubr.f32.gmra.mrb[0].mxu0 %v148
  %v302 = vpop.f32.mrb[0].mxu0
  %v303 = vadd.f32 0.0, %v302
  %v304 = vpop.f32.mrb[0].mxu0
  %305 = vmatprep.mubr.f32.mxu0 0.0
  %306 = vmatmul.mubr.f32.gmra.mrb[0].mxu0 %v149
  %v307 = vpop.f32.mrb[0].mxu0
  %v308 = vadd.f32 0.0, %v307
  %v309 = vpop.f32.mrb[0].mxu0
  %310 = vdwg.mxu0
  %v311 = vld [vmem:[%s3] sm:$0xf]
  %v312 = vld [vmem:[%s3 + $0x4] sm:$0xf]
  %v313 = vld [vmem:[%s3 + $0x8] sm:$0xf]
  %v314 = vld [vmem:[%s3 + $0xc] sm:$0xf]
  %v315 = vld [vmem:[%s4] sm:$0x1]
  %s316 = smul.u32 0, 8
  %v317 = vstv %s316
  %v318 = vadd.s32 %v317, 1
  %v319 = vadd.s32 %v317, 2
  %v320 = vadd.s32 %v317, 3
  %v321 = vadd.s32 %v317, 4
  %v322 = vadd.s32 %v317, 5
  %v323 = vadd.s32 %v317, 6
  %v324 = vadd.s32 %v317, 7
  %v325 = vld [vmem:[%s1] sm:$0xff]
  %v326 = vld [vmem:[%s1 + $0x8] sm:$0xff]
  %vm327 = vcmp.lt.s32.totalorder %v317, %v325
  %vm328 = vcmp.lt.s32.totalorder %v317, %v326
  %vm329 = vcmp.lt.s32.totalorder %v318, %v325
  %vm330 = vcmp.lt.s32.totalorder %v318, %v326
  %vm331 = vcmp.lt.s32.totalorder %v319, %v325
  %vm332 = vcmp.lt.s32.totalorder %v319, %v326
  %vm333 = vcmp.lt.s32.totalorder %v320, %v325
  %vm334 = vcmp.lt.s32.totalorder %v320, %v326
  %vm335 = vcmp.lt.s32.totalorder %v321, %v325
  %vm336 = vcmp.lt.s32.totalorder %v321, %v326
  %vm337 = vcmp.lt.s32.totalorder %v322, %v325
  %vm338 = vcmp.lt.s32.totalorder %v322, %v326
  %vm339 = vcmp.lt.s32.totalorder %v323, %v325
  %vm340 = vcmp.lt.s32.totalorder %v323, %v326
  %vm341 = vcmp.lt.s32.totalorder %v324, %v325
  %vm342 = vcmp.lt.s32.totalorder %v324, %v326
  %v343 = vld [vmem:[#allocation2] sm:$0xff]
  %v344 = vld [vmem:[#allocation2 + $0x8] sm:$0xff]
  %v345 = vpack.c.bf16 %v344, %v343
  %v350 = vunpack.c.l.b16 %v311
  %v351 = vunpack.c.l.b16 %v312
  %v352 = vunpack.c.l.b16 %v313
  %v353 = vunpack.c.l.b16 %v314
  %v354 = vpack.c.b16 %v351, %v350
  %v355 = vpack.c.b16 %v353, %v352
  %vm358 = vcmask 261120
  %v360 = vsel %vm358, %v345, 0
  %362 = vmatprep.subr.bf16.mxu0 0
  %363 = vmatpush1.bf16.msra.mxu0 %v354
  %364 = vmatprep.subr.bf16.mxu0 0
  %365 = vmatpush1.bf16.msra.mxu0 %v355
  %366 = vmatprep.subr.bf16.mxu0 0
  %367 = vmatpush1.bf16.msra.mxu0 0
  %368 = vmatprep.subr.bf16.mxu0 0
  %369 = vmatpush1.bf16.msra.mxu0 0
  %370 = vmatprep.subr.bf16.mxu0 0
  %371 = vmatpush1.bf16.msra.mxu0 0
  %372 = vmatprep.subr.bf16.mxu0 0
  %373 = vmatpush1.bf16.msra.mxu0 0
  %374 = vmatprep.subr.bf16.mxu0 0
  %375 = vmatpush1.bf16.msra.mxu0 0
  %376 = vmatprep.subr.bf16.mxu0 0
  %377 = vmatpush1.bf16.msra.mxu0 0
  %378 = vmatprep.subr.bf16.mxu0 0
  %379 = vmatpush1.bf16.msra.mxu0 0
  %380 = vmatprep.subr.bf16.mxu0 0
  %381 = vmatpush1.bf16.msra.mxu0 0
  %382 = vmatprep.subr.bf16.mxu0 0
  %383 = vmatpush1.bf16.msra.mxu0 0
  %384 = vmatprep.subr.bf16.mxu0 0
  %385 = vmatpush1.bf16.msra.mxu0 0
  %386 = vmatprep.subr.bf16.mxu0 0
  %387 = vmatpush1.bf16.msra.mxu0 0
  %388 = vmatprep.subr.bf16.mxu0 0
  %389 = vmatpush1.bf16.msra.mxu0 0
  %390 = vmatprep.subr.bf16.mxu0 0
  %391 = vmatpush1.bf16.msra.mxu0 0
  %392 = vmatprep.subr.bf16.mxu0 0
  %393 = vmatpush1.bf16.msra.mxu0 0
  %394 = vmatprep.mubr.bf16.mxu0 0
  %395 = vmatmul.mubr.bf16.gmra.mrb[0].mxu0 %v360
  %v396 = vpop.f32.mrb[0].mxu0
  %v397 = vadd.f32 0.0, %v396
  %v398 = vpop.f32.mrb[0].mxu0
  %v399 = vpop.f32.mrb[0].mxu0
  %v400 = vadd.f32 0.0, %v399
  %v401 = vpop.f32.mrb[0].mxu0
  %402 = vdwg.mxu0
  %v403 = vadd.f32 %v233, %v397
  %v404 = vadd.f32 %v238, %v400
  %v405 = vxor.u32 %v403, 2147483648
  %v406 = vxor.u32 %v404, 2147483648
  %v407 = vmul.f32 %v405, 1.442695
  %v408 = vpow.pop %v407
  %v409 = vmul.f32 %v406, 1.442695
  %v410 = vpow.pop %v409
  %v411 = vadd.f32 %v408, 1.0
  %v412 = vadd.f32 %v410, 1.0
  %v413 = vrcp.pop %v411
  %v414 = vmul.f32 1.0, %v413
  %v415 = vrcp.pop %v412
  %v416 = vmul.f32 1.0, %v415
  %v418 = vlaneseq
  %v419 = vshrl.u32 %v418, 7
  %v420 = vsub.s32 0, %v419
  %v421 = vrot.slane %v315, %v420
  %422 = vrot.lane.b32.xlu0 %v421, 64
  %v423 = vpop.permute.xlu0 %422
  %v425 = vadd.f32 %v397, %v423
  %v426 = vadd.f32 %v400, %v423
  %429 = vrot.lane.b32.xlu0 %v425, 64
  %v430 = vpop.permute.xlu0 %429
  %431 = vrot.lane.b32.xlu0 %v426, 64
  %v432 = vpop.permute.xlu0 %431
  %v435 = vmul.f32 %v414, %v430
  %v436 = vmul.f32 %v416, %v432
  %439 = vrot.lane.b32.xlu0 %v435, 64
  %v440 = vpop.permute.xlu0 %439
  %441 = vrot.lane.b32.xlu0 %v436, 64
  %v442 = vpop.permute.xlu0 %441
  %v445 = vadd.f32 %v233, %v440
  %v446 = vadd.f32 %v238, %v442
  %v447 = vtanh.pop %v445
  %v448 = vtanh.pop %v446
  %v449 = vsub.f32 1.0, %v414
  %v450 = vsub.f32 1.0, %v416
  %453 = vrot.lane.b32.xlu0 %v447, 96
  %v454 = vpop.permute.xlu0 %453
  %455 = vrot.lane.b32.xlu0 %v448, 96
  %v456 = vpop.permute.xlu0 %455
  %v459 = vmul.f32 %v449, %v454
  %v460 = vmul.f32 %v450, %v456
  %463 = vrot.lane.b32.xlu0 %v343, 32
  %v464 = vpop.permute.xlu0 %463
  %465 = vrot.lane.b32.xlu0 %v344, 32
  %v466 = vpop.permute.xlu0 %465
  %v469 = vmul.f32 %v414, %v464
  %v470 = vmul.f32 %v416, %v466
  %v471 = vadd.f32 %v459, %v469
  %v472 = vadd.f32 %v460, %v470
  %v473 = vsel %vm327, 1, 0
  %v474 = vsel %vm328, 1, 0
  %475 = vset.pattern.permute.xlu0 0
  %476 = vperm.xlu0 %475, %v473
  %v477 = vpop.permute.xlu0 %476
  %478 = vset.pattern.permute.xlu0 0
  %479 = vperm.xlu0 %478, %v474
  %v480 = vpop.permute.xlu0 %479
  %vm481 = vcmp.eq.s32.totalorder %v477, 1
  %vm482 = vcmp.eq.s32.totalorder %v480, 1
  %v483 = vsel %vm481, %v471, %v464
  %v484 = vsel %vm482, %v472, %v466
  %v485 = vpack.c.bf16 %v484, %v483
  %487 = vrot.lane.b32.xlu0 %v485, 96
  %v488 = vpop.permute.xlu0 %487
  %v490 = vsel %vm358, %v488, 0
  %492 = vmatprep.subr.bf16.mxu0 0
  %493 = vmatpush1.bf16.msra.mxu0 %v354
  %494 = vmatprep.subr.bf16.mxu0 0
  %495 = vmatpush1.bf16.msra.mxu0 %v355
  %496 = vmatprep.subr.bf16.mxu0 0
  %497 = vmatpush1.bf16.msra.mxu0 0
  %498 = vmatprep.subr.bf16.mxu0 0
  %499 = vmatpush1.bf16.msra.mxu0 0
  %500 = vmatprep.subr.bf16.mxu0 0
  %501 = vmatpush1.bf16.msra.mxu0 0
  %502 = vmatprep.subr.bf16.mxu0 0
  %503 = vmatpush1.bf16.msra.mxu0 0
  %504 = vmatprep.subr.bf16.mxu0 0
  %505 = vmatpush1.bf16.msra.mxu0 0
  %506 = vmatprep.subr.bf16.mxu0 0
  %507 = vmatpush1.bf16.msra.mxu0 0
  %508 = vmatprep.subr.bf16.mxu0 0
  %509 = vmatpush1.bf16.msra.mxu0 0
  %510 = vmatprep.subr.bf16.mxu0 0
  %511 = vmatpush1.bf16.msra.mxu0 0
  %512 = vmatprep.subr.bf16.mxu0 0
  %513 = vmatpush1.bf16.msra.mxu0 0
  %514 = vmatprep.subr.bf16.mxu0 0
  %515 = vmatpush1.bf16.msra.mxu0 0
  %516 = vmatprep.subr.bf16.mxu0 0
  %517 = vmatpush1.bf16.msra.mxu0 0
  %518 = vmatprep.subr.bf16.mxu0 0
  %519 = vmatpush1.bf16.msra.mxu0 0
  %520 = vmatprep.subr.bf16.mxu0 0
  %521 = vmatpush1.bf16.msra.mxu0 0
  %522 = vmatprep.subr.bf16.mxu0 0
  %523 = vmatpush1.bf16.msra.mxu0 0
  %524 = vmatprep.mubr.bf16.mxu0 0
  %525 = vmatmul.mubr.bf16.gmra.mrb[0].mxu0 %v490
  %v526 = vpop.f32.mrb[0].mxu0
  %v527 = vadd.f32 0.0, %v526
  %v528 = vpop.f32.mrb[0].mxu0
  %v529 = vpop.f32.mrb[0].mxu0
  %v530 = vadd.f32 0.0, %v529
  %v531 = vpop.f32.mrb[0].mxu0
  %532 = vdwg.mxu0
  %v533 = vadd.f32 %v243, %v527
  %v534 = vadd.f32 %v248, %v530
  %v535 = vxor.u32 %v533, 2147483648
  %v536 = vxor.u32 %v534, 2147483648
  %v537 = vmul.f32 %v535, 1.442695
  %v538 = vpow.pop %v537
  %v539 = vmul.f32 %v536, 1.442695
  %v540 = vpow.pop %v539
  %v541 = vadd.f32 %v538, 1.0
  %v542 = vadd.f32 %v540, 1.0
  %v543 = vrcp.pop %v541
  %v544 = vmul.f32 1.0, %v543
  %v545 = vrcp.pop %v542
  %v546 = vmul.f32 1.0, %v545
  %v547 = vadd.f32 %v527, %v423
  %v548 = vadd.f32 %v530, %v423
  %551 = vrot.lane.b32.xlu0 %v547, 64
  %v552 = vpop.permute.xlu0 %551
  %553 = vrot.lane.b32.xlu0 %v548, 64
  %v554 = vpop.permute.xlu0 %553
  %v557 = vmul.f32 %v544, %v552
  %v558 = vmul.f32 %v546, %v554
  %561 = vrot.lane.b32.xlu0 %v557, 64
  %v562 = vpop.permute.xlu0 %561
  %563 = vrot.lane.b32.xlu0 %v558, 64
  %v564 = vpop.permute.xlu0 %563
  %v567 = vadd.f32 %v243, %v562
  %v568 = vadd.f32 %v248, %v564
  %v569 = vtanh.pop %v567
  %v570 = vtanh.pop %v568
  %v571 = vsub.f32 1.0, %v544
  %v572 = vsub.f32 1.0, %v546
  %575 = vrot.lane.b32.xlu0 %v569, 96
  %v576 = vpop.permute.xlu0 %575
  %577 = vrot.lane.b32.xlu0 %v570, 96
  %v578 = vpop.permute.xlu0 %577
  %v581 = vmul.f32 %v571, %v576
  %v582 = vmul.f32 %v572, %v578
  %v583 = vmul.f32 %v544, %v483
  %v584 = vmul.f32 %v546, %v484
  %v585 = vadd.f32 %v581, %v583
  %v586 = vadd.f32 %v582, %v584
  %v587 = vsel %vm329, 1, 0
  %v588 = vsel %vm330, 1, 0
  %589 = vset.pattern.permute.xlu0 0
  %590 = vperm.xlu0 %589, %v587
  %v591 = vpop.permute.xlu0 %590
  %592 = vset.pattern.permute.xlu0 0
  %593 = vperm.xlu0 %592, %v588
  %v594 = vpop.permute.xlu0 %593
  %vm595 = vcmp.eq.s32.totalorder %v591, 1
  %vm596 = vcmp.eq.s32.totalorder %v594, 1
  %v597 = vsel %vm595, %v585, %v483
  %v598 = vsel %vm596, %v586, %v484
  %v599 = vpack.c.bf16 %v598, %v597
  %601 = vrot.lane.b32.xlu0 %v599, 96
  %v602 = vpop.permute.xlu0 %601
  %v604 = vsel %vm358, %v602, 0
  %606 = vmatprep.subr.bf16.mxu0 0
  %607 = vmatpush1.bf16.msra.mxu0 %v354
  %608 = vmatprep.subr.bf16.mxu0 0
  %609 = vmatpush1.bf16.msra.mxu0 %v355
  %610 = vmatprep.subr.bf16.mxu0 0
  %611 = vmatpush1.bf16.msra.mxu0 0
  %612 = vmatprep.subr.bf16.mxu0 0
  %613 = vmatpush1.bf16.msra.mxu0 0
  %614 = vmatprep.subr.bf16.mxu0 0
  %615 = vmatpush1.bf16.msra.mxu0 0
  %616 = vmatprep.subr.bf16.mxu0 0
  %617 = vmatpush1.bf16.msra.mxu0 0
  %618 = vmatprep.subr.bf16.mxu0 0
  %619 = vmatpush1.bf16.msra.mxu0 0
  %620 = vmatprep.subr.bf16.mxu0 0
  %621 = vmatpush1.bf16.msra.mxu0 0
  %622 = vmatprep.subr.bf16.mxu0 0
  %623 = vmatpush1.bf16.msra.mxu0 0
  %624 = vmatprep.subr.bf16.mxu0 0
  %625 = vmatpush1.bf16.msra.mxu0 0
  %626 = vmatprep.subr.bf16.mxu0 0
  %627 = vmatpush1.bf16.msra.mxu0 0
  %628 = vmatprep.subr.bf16.mxu0 0
  %629 = vmatpush1.bf16.msra.mxu0 0
  %630 = vmatprep.subr.bf16.mxu0 0
  %631 = vmatpush1.bf16.msra.mxu0 0
  %632 = vmatprep.subr.bf16.mxu0 0
  %633 = vmatpush1.bf16.msra.mxu0 0
  %634 = vmatprep.subr.bf16.mxu0 0
  %635 = vmatpush1.bf16.msra.mxu0 0
  %636 = vmatprep.subr.bf16.mxu0 0
  %637 = vmatpush1.bf16.msra.mxu0 0
  %638 = vmatprep.mubr.bf16.mxu0 0
  %639 = vmatmul.mubr.bf16.gmra.mrb[0].mxu0 %v604
  %v640 = vpop.f32.mrb[0].mxu0
  %v641 = vadd.f32 0.0, %v640
  %v642 = vpop.f32.mrb[0].mxu0
  %v643 = vpop.f32.mrb[0].mxu0
  %v644 = vadd.f32 0.0, %v643
  %v645 = vpop.f32.mrb[0].mxu0
  %646 = vdwg.mxu0
  %v647 = vadd.f32 %v253, %v641
  %v648 = vadd.f32 %v258, %v644
  %v649 = vxor.u32 %v647, 2147483648
  %v650 = vxor.u32 %v648, 2147483648
  %v651 = vmul.f32 %v649, 1.442695
  %v652 = vpow.pop %v651
  %v653 = vmul.f32 %v650, 1.442695
  %v654 = vpow.pop %v653
  %v655 = vadd.f32 %v652, 1.0
  %v656 = vadd.f32 %v654, 1.0
  %v657 = vrcp.pop %v655
  %v658 = vmul.f32 1.0, %v657
  %v659 = vrcp.pop %v656
  %v660 = vmul.f32 1.0, %v659
  %v661 = vadd.f32 %v641, %v423
  %v662 = vadd.f32 %v644, %v423
  %665 = vrot.lane.b32.xlu0 %v661, 64
  %v666 = vpop.permute.xlu0 %665
  %667 = vrot.lane.b32.xlu0 %v662, 64
  %v668 = vpop.permute.xlu0 %667
  %v671 = vmul.f32 %v658, %v666
  %v672 = vmul.f32 %v660, %v668
  %675 = vrot.lane.b32.xlu0 %v671, 64
  %v676 = vpop.permute.xlu0 %675
  %677 = vrot.lane.b32.xlu0 %v672, 64
  %v678 = vpop.permute.xlu0 %677
  %v681 = vadd.f32 %v253, %v676
  %v682 = vadd.f32 %v258, %v678
  %v683 = vtanh.pop %v681
  %v684 = vtanh.pop %v682
  %v685 = vsub.f32 1.0, %v658
  %v686 = vsub.f32 1.0, %v660
  %689 = vrot.lane.b32.xlu0 %v683, 96
  %v690 = vpop.permute.xlu0 %689
  %691 = vrot.lane.b32.xlu0 %v684, 96
  %v692 = vpop.permute.xlu0 %691
  %v695 = vmul.f32 %v685, %v690
  %v696 = vmul.f32 %v686, %v692
  %v697 = vmul.f32 %v658, %v597
  %v698 = vmul.f32 %v660, %v598
  %v699 = vadd.f32 %v695, %v697
  %v700 = vadd.f32 %v696, %v698
  %v701 = vsel %vm331, 1, 0
  %v702 = vsel %vm332, 1, 0
  %703 = vset.pattern.permute.xlu0 0
  %704 = vperm.xlu0 %703, %v701
  %v705 = vpop.permute.xlu0 %704
  %706 = vset.pattern.permute.xlu0 0
  %707 = vperm.xlu0 %706, %v702
  %v708 = vpop.permute.xlu0 %707
  %vm709 = vcmp.eq.s32.totalorder %v705, 1
  %vm710 = vcmp.eq.s32.totalorder %v708, 1
  %v711 = vsel %vm709, %v699, %v597
  %v712 = vsel %vm710, %v700, %v598
  %v713 = vpack.c.bf16 %v712, %v711
  %715 = vrot.lane.b32.xlu0 %v713, 96
  %v716 = vpop.permute.xlu0 %715
  %v718 = vsel %vm358, %v716, 0
  %720 = vmatprep.subr.bf16.mxu0 0
  %721 = vmatpush1.bf16.msra.mxu0 %v354
  %722 = vmatprep.subr.bf16.mxu0 0
  %723 = vmatpush1.bf16.msra.mxu0 %v355
  %724 = vmatprep.subr.bf16.mxu0 0
  %725 = vmatpush1.bf16.msra.mxu0 0
  %726 = vmatprep.subr.bf16.mxu0 0
  %727 = vmatpush1.bf16.msra.mxu0 0
  %728 = vmatprep.subr.bf16.mxu0 0
  %729 = vmatpush1.bf16.msra.mxu0 0
  %730 = vmatprep.subr.bf16.mxu0 0
  %731 = vmatpush1.bf16.msra.mxu0 0
  %732 = vmatprep.subr.bf16.mxu0 0
  %733 = vmatpush1.bf16.msra.mxu0 0
  %734 = vmatprep.subr.bf16.mxu0 0
  %735 = vmatpush1.bf16.msra.mxu0 0
  %736 = vmatprep.subr.bf16.mxu0 0
  %737 = vmatpush1.bf16.msra.mxu0 0
  %738 = vmatprep.subr.bf16.mxu0 0
  %739 = vmatpush1.bf16.msra.mxu0 0
  %740 = vmatprep.subr.bf16.mxu0 0
  %741 = vmatpush1.bf16.msra.mxu0 0
  %742 = vmatprep.subr.bf16.mxu0 0
  %743 = vmatpush1.bf16.msra.mxu0 0
  %744 = vmatprep.subr.bf16.mxu0 0
  %745 = vmatpush1.bf16.msra.mxu0 0
  %746 = vmatprep.subr.bf16.mxu0 0
  %747 = vmatpush1.bf16.msra.mxu0 0
  %748 = vmatprep.subr.bf16.mxu0 0
  %749 = vmatpush1.bf16.msra.mxu0 0
  %750 = vmatprep.subr.bf16.mxu0 0
  %751 = vmatpush1.bf16.msra.mxu0 0
  %752 = vmatprep.mubr.bf16.mxu0 0
  %753 = vmatmul.mubr.bf16.gmra.mrb[0].mxu0 %v718
  %v754 = vpop.f32.mrb[0].mxu0
  %v755 = vadd.f32 0.0, %v754
  %v756 = vpop.f32.mrb[0].mxu0
  %v757 = vpop.f32.mrb[0].mxu0
  %v758 = vadd.f32 0.0, %v757
  %v759 = vpop.f32.mrb[0].mxu0
  %760 = vdwg.mxu0
  %v761 = vadd.f32 %v263, %v755
  %v762 = vadd.f32 %v268, %v758
  %v763 = vxor.u32 %v761, 2147483648
  %v764 = vxor.u32 %v762, 2147483648
  %v765 = vmul.f32 %v763, 1.442695
  %v766 = vpow.pop %v765
  %v767 = vmul.f32 %v764, 1.442695
  %v768 = vpow.pop %v767
  %v769 = vadd.f32 %v766, 1.0
  %v770 = vadd.f32 %v768, 1.0
  %v771 = vrcp.pop %v769
  %v772 = vmul.f32 1.0, %v771
  %v773 = vrcp.pop %v770
  %v774 = vmul.f32 1.0, %v773
  %v775 = vadd.f32 %v755, %v423
  %v776 = vadd.f32 %v758, %v423
  %779 = vrot.lane.b32.xlu0 %v775, 64
  %v780 = vpop.permute.xlu0 %779
  %781 = vrot.lane.b32.xlu0 %v776, 64
  %v782 = vpop.permute.xlu0 %781
  %v785 = vmul.f32 %v772, %v780
  %v786 = vmul.f32 %v774, %v782
  %789 = vrot.lane.b32.xlu0 %v785, 64
  %v790 = vpop.permute.xlu0 %789
  %791 = vrot.lane.b32.xlu0 %v786, 64
  %v792 = vpop.permute.xlu0 %791
  %v795 = vadd.f32 %v263, %v790
  %v796 = vadd.f32 %v268, %v792
  %v797 = vtanh.pop %v795
  %v798 = vtanh.pop %v796
  %v799 = vsub.f32 1.0, %v772
  %v800 = vsub.f32 1.0, %v774
  %803 = vrot.lane.b32.xlu0 %v797, 96
  %v804 = vpop.permute.xlu0 %803
  %805 = vrot.lane.b32.xlu0 %v798, 96
  %v806 = vpop.permute.xlu0 %805
  %v809 = vmul.f32 %v799, %v804
  %v810 = vmul.f32 %v800, %v806
  %v811 = vmul.f32 %v772, %v711
  %v812 = vmul.f32 %v774, %v712
  %v813 = vadd.f32 %v809, %v811
  %v814 = vadd.f32 %v810, %v812
  %v815 = vsel %vm333, 1, 0
  %v816 = vsel %vm334, 1, 0
  %817 = vset.pattern.permute.xlu0 0
  %818 = vperm.xlu0 %817, %v815
  %v819 = vpop.permute.xlu0 %818
  %820 = vset.pattern.permute.xlu0 0
  %821 = vperm.xlu0 %820, %v816
  %v822 = vpop.permute.xlu0 %821
  %vm823 = vcmp.eq.s32.totalorder %v819, 1
  %vm824 = vcmp.eq.s32.totalorder %v822, 1
  %v825 = vsel %vm823, %v813, %v711
  %v826 = vsel %vm824, %v814, %v712
  %v827 = vpack.c.bf16 %v826, %v825
  %829 = vrot.lane.b32.xlu0 %v827, 96
  %v830 = vpop.permute.xlu0 %829
  %v832 = vsel %vm358, %v830, 0
  %834 = vmatprep.subr.bf16.mxu0 0
  %835 = vmatpush1.bf16.msra.mxu0 %v354
  %836 = vmatprep.subr.bf16.mxu0 0
  %837 = vmatpush1.bf16.msra.mxu0 %v355
  %838 = vmatprep.subr.bf16.mxu0 0
  %839 = vmatpush1.bf16.msra.mxu0 0
  %840 = vmatprep.subr.bf16.mxu0 0
  %841 = vmatpush1.bf16.msra.mxu0 0
  %842 = vmatprep.subr.bf16.mxu0 0
  %843 = vmatpush1.bf16.msra.mxu0 0
  %844 = vmatprep.subr.bf16.mxu0 0
  %845 = vmatpush1.bf16.msra.mxu0 0
  %846 = vmatprep.subr.bf16.mxu0 0
  %847 = vmatpush1.bf16.msra.mxu0 0
  %848 = vmatprep.subr.bf16.mxu0 0
  %849 = vmatpush1.bf16.msra.mxu0 0
  %850 = vmatprep.subr.bf16.mxu0 0
  %851 = vmatpush1.bf16.msra.mxu0 0
  %852 = vmatprep.subr.bf16.mxu0 0
  %853 = vmatpush1.bf16.msra.mxu0 0
  %854 = vmatprep.subr.bf16.mxu0 0
  %855 = vmatpush1.bf16.msra.mxu0 0
  %856 = vmatprep.subr.bf16.mxu0 0
  %857 = vmatpush1.bf16.msra.mxu0 0
  %858 = vmatprep.subr.bf16.mxu0 0
  %859 = vmatpush1.bf16.msra.mxu0 0
  %860 = vmatprep.subr.bf16.mxu0 0
  %861 = vmatpush1.bf16.msra.mxu0 0
  %862 = vmatprep.subr.bf16.mxu0 0
  %863 = vmatpush1.bf16.msra.mxu0 0
  %864 = vmatprep.subr.bf16.mxu0 0
  %865 = vmatpush1.bf16.msra.mxu0 0
  %866 = vmatprep.mubr.bf16.mxu0 0
  %867 = vmatmul.mubr.bf16.gmra.mrb[0].mxu0 %v832
  %v868 = vpop.f32.mrb[0].mxu0
  %v869 = vadd.f32 0.0, %v868
  %v870 = vpop.f32.mrb[0].mxu0
  %v871 = vpop.f32.mrb[0].mxu0
  %v872 = vadd.f32 0.0, %v871
  %v873 = vpop.f32.mrb[0].mxu0
  %874 = vdwg.mxu0
  %v875 = vadd.f32 %v273, %v869
  %v876 = vadd.f32 %v278, %v872
  %v877 = vxor.u32 %v875, 2147483648
  %v878 = vxor.u32 %v876, 2147483648
  %v879 = vmul.f32 %v877, 1.442695
  %v880 = vpow.pop %v879
  %v881 = vmul.f32 %v878, 1.442695
  %v882 = vpow.pop %v881
  %v883 = vadd.f32 %v880, 1.0
  %v884 = vadd.f32 %v882, 1.0
  %v885 = vrcp.pop %v883
  %v886 = vmul.f32 1.0, %v885
  %v887 = vrcp.pop %v884
  %v888 = vmul.f32 1.0, %v887
  %v889 = vadd.f32 %v869, %v423
  %v890 = vadd.f32 %v872, %v423
  %893 = vrot.lane.b32.xlu0 %v889, 64
  %v894 = vpop.permute.xlu0 %893
  %895 = vrot.lane.b32.xlu0 %v890, 64
  %v896 = vpop.permute.xlu0 %895
  %v899 = vmul.f32 %v886, %v894
  %v900 = vmul.f32 %v888, %v896
  %903 = vrot.lane.b32.xlu0 %v899, 64
  %v904 = vpop.permute.xlu0 %903
  %905 = vrot.lane.b32.xlu0 %v900, 64
  %v906 = vpop.permute.xlu0 %905
  %v909 = vadd.f32 %v273, %v904
  %v910 = vadd.f32 %v278, %v906
  %v911 = vtanh.pop %v909
  %v912 = vtanh.pop %v910
  %v913 = vsub.f32 1.0, %v886
  %v914 = vsub.f32 1.0, %v888
  %917 = vrot.lane.b32.xlu0 %v911, 96
  %v918 = vpop.permute.xlu0 %917
  %919 = vrot.lane.b32.xlu0 %v912, 96
  %v920 = vpop.permute.xlu0 %919
  %v923 = vmul.f32 %v913, %v918
  %v924 = vmul.f32 %v914, %v920
  %v925 = vmul.f32 %v886, %v825
  %v926 = vmul.f32 %v888, %v826
  %v927 = vadd.f32 %v923, %v925
  %v928 = vadd.f32 %v924, %v926
  %v929 = vsel %vm335, 1, 0
  %v930 = vsel %vm336, 1, 0
  %931 = vset.pattern.permute.xlu0 0
  %932 = vperm.xlu0 %931, %v929
  %v933 = vpop.permute.xlu0 %932
  %934 = vset.pattern.permute.xlu0 0
  %935 = vperm.xlu0 %934, %v930
  %v936 = vpop.permute.xlu0 %935
  %vm937 = vcmp.eq.s32.totalorder %v933, 1
  %vm938 = vcmp.eq.s32.totalorder %v936, 1
  %v939 = vsel %vm937, %v927, %v825
  %v940 = vsel %vm938, %v928, %v826
  %v941 = vpack.c.bf16 %v940, %v939
  %943 = vrot.lane.b32.xlu0 %v941, 96
  %v944 = vpop.permute.xlu0 %943
  %v946 = vsel %vm358, %v944, 0
  %948 = vmatprep.subr.bf16.mxu0 0
  %949 = vmatpush1.bf16.msra.mxu0 %v354
  %950 = vmatprep.subr.bf16.mxu0 0
  %951 = vmatpush1.bf16.msra.mxu0 %v355
  %952 = vmatprep.subr.bf16.mxu0 0
  %953 = vmatpush1.bf16.msra.mxu0 0
  %954 = vmatprep.subr.bf16.mxu0 0
  %955 = vmatpush1.bf16.msra.mxu0 0
  %956 = vmatprep.subr.bf16.mxu0 0
  %957 = vmatpush1.bf16.msra.mxu0 0
  %958 = vmatprep.subr.bf16.mxu0 0
  %959 = vmatpush1.bf16.msra.mxu0 0
  %960 = vmatprep.subr.bf16.mxu0 0
  %961 = vmatpush1.bf16.msra.mxu0 0
  %962 = vmatprep.subr.bf16.mxu0 0
  %963 = vmatpush1.bf16.msra.mxu0 0
  %964 = vmatprep.subr.bf16.mxu0 0
  %965 = vmatpush1.bf16.msra.mxu0 0
  %966 = vmatprep.subr.bf16.mxu0 0
  %967 = vmatpush1.bf16.msra.mxu0 0
  %968 = vmatprep.subr.bf16.mxu0 0
  %969 = vmatpush1.bf16.msra.mxu0 0
  %970 = vmatprep.subr.bf16.mxu0 0
  %971 = vmatpush1.bf16.msra.mxu0 0
  %972 = vmatprep.subr.bf16.mxu0 0
  %973 = vmatpush1.bf16.msra.mxu0 0
  %974 = vmatprep.subr.bf16.mxu0 0
  %975 = vmatpush1.bf16.msra.mxu0 0
  %976 = vmatprep.subr.bf16.mxu0 0
  %977 = vmatpush1.bf16.msra.mxu0 0
  %978 = vmatprep.subr.bf16.mxu0 0
  %979 = vmatpush1.bf16.msra.mxu0 0
  %980 = vmatprep.mubr.bf16.mxu0 0
  %981 = vmatmul.mubr.bf16.gmra.mrb[0].mxu0 %v946
  %v982 = vpop.f32.mrb[0].mxu0
  %v983 = vadd.f32 0.0, %v982
  %v984 = vpop.f32.mrb[0].mxu0
  %v985 = vpop.f32.mrb[0].mxu0
  %v986 = vadd.f32 0.0, %v985
  %v987 = vpop.f32.mrb[0].mxu0
  %988 = vdwg.mxu0
  %v989 = vadd.f32 %v283, %v983
  %v990 = vadd.f32 %v288, %v986
  %v991 = vxor.u32 %v989, 2147483648
  %v992 = vxor.u32 %v990, 2147483648
  %v993 = vmul.f32 %v991, 1.442695
  %v994 = vpow.pop %v993
  %v995 = vmul.f32 %v992, 1.442695
  %v996 = vpow.pop %v995
  %v997 = vadd.f32 %v994, 1.0
  %v998 = vadd.f32 %v996, 1.0
  %v999 = vrcp.pop %v997
  %v1000 = vmul.f32 1.0, %v999
  %v1001 = vrcp.pop %v998
  %v1002 = vmul.f32 1.0, %v1001
  %v1003 = vadd.f32 %v983, %v423
  %v1004 = vadd.f32 %v986, %v423
  %1007 = vrot.lane.b32.xlu0 %v1003, 64
  %v1008 = vpop.permute.xlu0 %1007
  %1009 = vrot.lane.b32.xlu0 %v1004, 64
  %v1010 = vpop.permute.xlu0 %1009
  %v1013 = vmul.f32 %v1000, %v1008
  %v1014 = vmul.f32 %v1002, %v1010
  %1017 = vrot.lane.b32.xlu0 %v1013, 64
  %v1018 = vpop.permute.xlu0 %1017
  %1019 = vrot.lane.b32.xlu0 %v1014, 64
  %v1020 = vpop.permute.xlu0 %1019
  %v1023 = vadd.f32 %v283, %v1018
  %v1024 = vadd.f32 %v288, %v1020
  %v1025 = vtanh.pop %v1023
  %v1026 = vtanh.pop %v1024
  %v1027 = vsub.f32 1.0, %v1000
  %v1028 = vsub.f32 1.0, %v1002
  %1031 = vrot.lane.b32.xlu0 %v1025, 96
  %v1032 = vpop.permute.xlu0 %1031
  %1033 = vrot.lane.b32.xlu0 %v1026, 96
  %v1034 = vpop.permute.xlu0 %1033
  %v1037 = vmul.f32 %v1027, %v1032
  %v1038 = vmul.f32 %v1028, %v1034
  %v1039 = vmul.f32 %v1000, %v939
  %v1040 = vmul.f32 %v1002, %v940
  %v1041 = vadd.f32 %v1037, %v1039
  %v1042 = vadd.f32 %v1038, %v1040
  %v1043 = vsel %vm337, 1, 0
  %v1044 = vsel %vm338, 1, 0
  %1045 = vset.pattern.permute.xlu0 0
  %1046 = vperm.xlu0 %1045, %v1043
  %v1047 = vpop.permute.xlu0 %1046
  %1048 = vset.pattern.permute.xlu0 0
  %1049 = vperm.xlu0 %1048, %v1044
  %v1050 = vpop.permute.xlu0 %1049
  %vm1051 = vcmp.eq.s32.totalorder %v1047, 1
  %vm1052 = vcmp.eq.s32.totalorder %v1050, 1
  %v1053 = vsel %vm1051, %v1041, %v939
  %v1054 = vsel %vm1052, %v1042, %v940
  %v1055 = vpack.c.bf16 %v1054, %v1053
  %1057 = vrot.lane.b32.xlu0 %v1055, 96
  %v1058 = vpop.permute.xlu0 %1057
  %v1060 = vsel %vm358, %v1058, 0
  %1062 = vmatprep.subr.bf16.mxu0 0
  %1063 = vmatpush1.bf16.msra.mxu0 %v354
  %1064 = vmatprep.subr.bf16.mxu0 0
  %1065 = vmatpush1.bf16.msra.mxu0 %v355
  %1066 = vmatprep.subr.bf16.mxu0 0
  %1067 = vmatpush1.bf16.msra.mxu0 0
  %1068 = vmatprep.subr.bf16.mxu0 0
  %1069 = vmatpush1.bf16.msra.mxu0 0
  %1070 = vmatprep.subr.bf16.mxu0 0
  %1071 = vmatpush1.bf16.msra.mxu0 0
  %1072 = vmatprep.subr.bf16.mxu0 0
  %1073 = vmatpush1.bf16.msra.mxu0 0
  %1074 = vmatprep.subr.bf16.mxu0 0
  %1075 = vmatpush1.bf16.msra.mxu0 0
  %1076 = vmatprep.subr.bf16.mxu0 0
  %1077 = vmatpush1.bf16.msra.mxu0 0
  %1078 = vmatprep.subr.bf16.mxu0 0
  %1079 = vmatpush1.bf16.msra.mxu0 0
  %1080 = vmatprep.subr.bf16.mxu0 0
  %1081 = vmatpush1.bf16.msra.mxu0 0
  %1082 = vmatprep.subr.bf16.mxu0 0
  %1083 = vmatpush1.bf16.msra.mxu0 0
  %1084 = vmatprep.subr.bf16.mxu0 0
  %1085 = vmatpush1.bf16.msra.mxu0 0
  %1086 = vmatprep.subr.bf16.mxu0 0
  %1087 = vmatpush1.bf16.msra.mxu0 0
  %1088 = vmatprep.subr.bf16.mxu0 0
  %1089 = vmatpush1.bf16.msra.mxu0 0
  %1090 = vmatprep.subr.bf16.mxu0 0
  %1091 = vmatpush1.bf16.msra.mxu0 0
  %1092 = vmatprep.subr.bf16.mxu0 0
  %1093 = vmatpush1.bf16.msra.mxu0 0
  %1094 = vmatprep.mubr.bf16.mxu0 0
  %1095 = vmatmul.mubr.bf16.gmra.mrb[0].mxu0 %v1060
  %v1096 = vpop.f32.mrb[0].mxu0
  %v1097 = vadd.f32 0.0, %v1096
  %v1098 = vpop.f32.mrb[0].mxu0
  %v1099 = vpop.f32.mrb[0].mxu0
  %v1100 = vadd.f32 0.0, %v1099
  %v1101 = vpop.f32.mrb[0].mxu0
  %1102 = vdwg.mxu0
  %v1103 = vadd.f32 %v293, %v1097
  %v1104 = vadd.f32 %v298, %v1100
  %v1105 = vxor.u32 %v1103, 2147483648
  %v1106 = vxor.u32 %v1104, 2147483648
  %v1107 = vmul.f32 %v1105, 1.442695
  %v1108 = vpow.pop %v1107
  %v1109 = vmul.f32 %v1106, 1.442695
  %v1110 = vpow.pop %v1109
  %v1111 = vadd.f32 %v1108, 1.0
  %v1112 = vadd.f32 %v1110, 1.0
  %v1113 = vrcp.pop %v1111
  %v1114 = vmul.f32 1.0, %v1113
  %v1115 = vrcp.pop %v1112
  %v1116 = vmul.f32 1.0, %v1115
  %v1117 = vadd.f32 %v1097, %v423
  %v1118 = vadd.f32 %v1100, %v423
  %1121 = vrot.lane.b32.xlu0 %v1117, 64
  %v1122 = vpop.permute.xlu0 %1121
  %1123 = vrot.lane.b32.xlu0 %v1118, 64
  %v1124 = vpop.permute.xlu0 %1123
  %v1127 = vmul.f32 %v1114, %v1122
  %v1128 = vmul.f32 %v1116, %v1124
  %1131 = vrot.lane.b32.xlu0 %v1127, 64
  %v1132 = vpop.permute.xlu0 %1131
  %1133 = vrot.lane.b32.xlu0 %v1128, 64
  %v1134 = vpop.permute.xlu0 %1133
  %v1137 = vadd.f32 %v293, %v1132
  %v1138 = vadd.f32 %v298, %v1134
  %v1139 = vtanh.pop %v1137
  %v1140 = vtanh.pop %v1138
  %v1141 = vsub.f32 1.0, %v1114
  %v1142 = vsub.f32 1.0, %v1116
  %1145 = vrot.lane.b32.xlu0 %v1139, 96
  %v1146 = vpop.permute.xlu0 %1145
  %1147 = vrot.lane.b32.xlu0 %v1140, 96
  %v1148 = vpop.permute.xlu0 %1147
  %v1151 = vmul.f32 %v1141, %v1146
  %v1152 = vmul.f32 %v1142, %v1148
  %v1153 = vmul.f32 %v1114, %v1053
  %v1154 = vmul.f32 %v1116, %v1054
  %v1155 = vadd.f32 %v1151, %v1153
  %v1156 = vadd.f32 %v1152, %v1154
  %v1157 = vsel %vm339, 1, 0
  %v1158 = vsel %vm340, 1, 0
  %1159 = vset.pattern.permute.xlu0 0
  %1160 = vperm.xlu0 %1159, %v1157
  %v1161 = vpop.permute.xlu0 %1160
  %1162 = vset.pattern.permute.xlu0 0
  %1163 = vperm.xlu0 %1162, %v1158
  %v1164 = vpop.permute.xlu0 %1163
  %vm1165 = vcmp.eq.s32.totalorder %v1161, 1
  %vm1166 = vcmp.eq.s32.totalorder %v1164, 1
  %v1167 = vsel %vm1165, %v1155, %v1053
  %v1168 = vsel %vm1166, %v1156, %v1054
  %v1169 = vpack.c.bf16 %v1168, %v1167
  %1171 = vrot.lane.b32.xlu0 %v1169, 96
  %v1172 = vpop.permute.xlu0 %1171
  %v1174 = vsel %vm358, %v1172, 0
  %1176 = vmatprep.subr.bf16.mxu0 0
  %1177 = vmatpush1.bf16.msra.mxu0 %v354
  %1178 = vmatprep.subr.bf16.mxu0 0
  %1179 = vmatpush1.bf16.msra.mxu0 %v355
  %1180 = vmatprep.subr.bf16.mxu0 0
  %1181 = vmatpush1.bf16.msra.mxu0 0
  %1182 = vmatprep.subr.bf16.mxu0 0
  %1183 = vmatpush1.bf16.msra.mxu0 0
  %1184 = vmatprep.subr.bf16.mxu0 0
  %1185 = vmatpush1.bf16.msra.mxu0 0
  %1186 = vmatprep.subr.bf16.mxu0 0
  %1187 = vmatpush1.bf16.msra.mxu0 0
  %1188 = vmatprep.subr.bf16.mxu0 0
  %1189 = vmatpush1.bf16.msra.mxu0 0
  %1190 = vmatprep.subr.bf16.mxu0 0
  %1191 = vmatpush1.bf16.msra.mxu0 0
  %1192 = vmatprep.subr.bf16.mxu0 0
  %1193 = vmatpush1.bf16.msra.mxu0 0
  %1194 = vmatprep.subr.bf16.mxu0 0
  %1195 = vmatpush1.bf16.msra.mxu0 0
  %1196 = vmatprep.subr.bf16.mxu0 0
  %1197 = vmatpush1.bf16.msra.mxu0 0
  %1198 = vmatprep.subr.bf16.mxu0 0
  %1199 = vmatpush1.bf16.msra.mxu0 0
  %1200 = vmatprep.subr.bf16.mxu0 0
  %1201 = vmatpush1.bf16.msra.mxu0 0
  %1202 = vmatprep.subr.bf16.mxu0 0
  %1203 = vmatpush1.bf16.msra.mxu0 0
  %1204 = vmatprep.subr.bf16.mxu0 0
  %1205 = vmatpush1.bf16.msra.mxu0 0
  %1206 = vmatprep.subr.bf16.mxu0 0
  %1207 = vmatpush1.bf16.msra.mxu0 0
  %1208 = vmatprep.mubr.bf16.mxu0 0
  %1209 = vmatmul.mubr.bf16.gmra.mrb[0].mxu0 %v1174
  %v1210 = vpop.f32.mrb[0].mxu0
  %v1211 = vadd.f32 0.0, %v1210
  %v1212 = vpop.f32.mrb[0].mxu0
  %v1213 = vpop.f32.mrb[0].mxu0
  %v1214 = vadd.f32 0.0, %v1213
  %v1215 = vpop.f32.mrb[0].mxu0
  %1216 = vdwg.mxu0
  %v1217 = vadd.f32 %v303, %v1211
  %v1218 = vadd.f32 %v308, %v1214
  %v1219 = vxor.u32 %v1217, 2147483648
  %v1220 = vxor.u32 %v1218, 2147483648
  %v1221 = vmul.f32 %v1219, 1.442695
  %v1222 = vpow.pop %v1221
  %v1223 = vmul.f32 %v1220, 1.442695
  %v1224 = vpow.pop %v1223
  %v1225 = vadd.f32 %v1222, 1.0
  %v1226 = vadd.f32 %v1224, 1.0
  %v1227 = vrcp.pop %v1225
  %v1228 = vmul.f32 1.0, %v1227
  %v1229 = vrcp.pop %v1226
  %v1230 = vmul.f32 1.0, %v1229
  %v1231 = vadd.f32 %v1211, %v423
  %v1232 = vadd.f32 %v1214, %v423
  %1235 = vrot.lane.b32.xlu0 %v1231, 64
  %v1236 = vpop.permute.xlu0 %1235
  %1237 = vrot.lane.b32.xlu0 %v1232, 64
  %v1238 = vpop.permute.xlu0 %1237
  %v1241 = vmul.f32 %v1228, %v1236
  %v1242 = vmul.f32 %v1230, %v1238
  %1245 = vrot.lane.b32.xlu0 %v1241, 64
  %v1246 = vpop.permute.xlu0 %1245
  %1247 = vrot.lane.b32.xlu0 %v1242, 64
  %v1248 = vpop.permute.xlu0 %1247
  %v1251 = vadd.f32 %v303, %v1246
  %v1252 = vadd.f32 %v308, %v1248
  %v1253 = vtanh.pop %v1251
  %v1254 = vtanh.pop %v1252
  %v1255 = vsub.f32 1.0, %v1228
  %v1256 = vsub.f32 1.0, %v1230
  %1259 = vrot.lane.b32.xlu0 %v1253, 96
  %v1260 = vpop.permute.xlu0 %1259
  %1261 = vrot.lane.b32.xlu0 %v1254, 96
  %v1262 = vpop.permute.xlu0 %1261
  %v1265 = vmul.f32 %v1255, %v1260
  %v1266 = vmul.f32 %v1256, %v1262
  %v1267 = vmul.f32 %v1228, %v1167
  %v1268 = vmul.f32 %v1230, %v1168
  %v1269 = vadd.f32 %v1265, %v1267
  %v1270 = vadd.f32 %v1266, %v1268
  %v1271 = vsel %vm341, 1, 0
  %v1272 = vsel %vm342, 1, 0
  %1273 = vset.pattern.permute.xlu0 0
  %1274 = vperm.xlu0 %1273, %v1271
  %v1275 = vpop.permute.xlu0 %1274
  %1276 = vset.pattern.permute.xlu0 0
  %1277 = vperm.xlu0 %1276, %v1272
  %v1278 = vpop.permute.xlu0 %1277
  %vm1279 = vcmp.eq.s32.totalorder %v1275, 1
  %vm1280 = vcmp.eq.s32.totalorder %v1278, 1
  %v1281 = vsel %vm1279, %v1269, %v1167
  %v1282 = vsel %vm1280, %v1270, %v1168
  %1285 = vrot.lane.b32.xlu0 %v1281, 96
  %v1286 = vpop.permute.xlu0 %1285
  %1287 = vrot.lane.b32.xlu0 %v1282, 96
  %v1288 = vpop.permute.xlu0 %1287
  %1291 = vst.msk [vmem:[#allocation2] sm:$0xff] %vm358, %v1286
  %1292 = vst.msk [vmem:[#allocation2 + $0x8] sm:$0xff] %vm358, %v1288
  // Predicated region
  $region34: #{tpu_custom_call.1} parent=0 // pred_check
    %p1293 = pneg %p29
  $region35: #{tpu_custom_call.1} parent=0 // pred_check_branch
    %1295 = sbr.rel (%p1293) target = $region37
  $region36: #{tpu_custom_call.1} parent=0 // pred_region
    %v1296 = vpack.c.bf16 %v1282, %v1281
    %v1297 = vld [vmem:[%s5] sm:$0xf]
    %v1298 = vld [vmem:[%s5 + $0x4] sm:$0xf]
    %v1299 = vld [vmem:[%s5 + $0x8] sm:$0xf]
    %v1300 = vld [vmem:[%s5 + $0xc] sm:$0xf]
    %v1301 = vld [vmem:[%s6] sm:$0x1]
    %v1303 = vlaneseq
    %v1304 = vshrl.u32 %v1303, 7
    %v1305 = vsub.s32 0, %v1304
    %v1306 = vrot.slane %v1301, %v1305
    %1309 = vrot.lane.b32.xlu0 %v1296, 96
    %v1310 = vpop.permute.xlu0 %1309
    %v1315 = vunpack.c.l.b16 %v1297
    %v1316 = vunpack.c.l.b16 %v1298
    %v1317 = vunpack.c.l.b16 %v1299
    %v1318 = vunpack.c.l.b16 %v1300
    %v1319 = vpack.c.b16 %v1316, %v1315
    %v1320 = vpack.c.b16 %v1318, %v1317
    %v1324 = vsel %vm358, %v1310, 0
    %1326 = vmatprep.subr.bf16.mxu0 0
    %1327 = vmatpush1.bf16.msra.mxu0 %v1319
    %1328 = vmatprep.subr.bf16.mxu0 0
    %1329 = vmatpush1.bf16.msra.mxu0 %v1320
    %1330 = vmatprep.subr.bf16.mxu0 0
    %1331 = vmatpush1.bf16.msra.mxu0 0
    %1332 = vmatprep.subr.bf16.mxu0 0
    %1333 = vmatpush1.bf16.msra.mxu0 0
    %1334 = vmatprep.subr.bf16.mxu0 0
    %1335 = vmatpush1.bf16.msra.mxu0 0
    %1336 = vmatprep.subr.bf16.mxu0 0
    %1337 = vmatpush1.bf16.msra.mxu0 0
    %1338 = vmatprep.subr.bf16.mxu0 0
    %1339 = vmatpush1.bf16.msra.mxu0 0
    %1340 = vmatprep.subr.bf16.mxu0 0
    %1341 = vmatpush1.bf16.msra.mxu0 0
    %1342 = vmatprep.subr.bf16.mxu0 0
    %1343 = vmatpush1.bf16.msra.mxu0 0
    %1344 = vmatprep.subr.bf16.mxu0 0
    %1345 = vmatpush1.bf16.msra.mxu0 0
    %1346 = vmatprep.subr.bf16.mxu0 0
    %1347 = vmatpush1.bf16.msra.mxu0 0
    %1348 = vmatprep.subr.bf16.mxu0 0
    %1349 = vmatpush1.bf16.msra.mxu0 0
    %1350 = vmatprep.subr.bf16.mxu0 0
    %1351 = vmatpush1.bf16.msra.mxu0 0
    %1352 = vmatprep.subr.bf16.mxu0 0
    %1353 = vmatpush1.bf16.msra.mxu0 0
    %1354 = vmatprep.subr.bf16.mxu0 0
    %1355 = vmatpush1.bf16.msra.mxu0 0
    %1356 = vmatprep.subr.bf16.mxu0 0
    %1357 = vmatpush1.bf16.msra.mxu0 0
    %1358 = vmatprep.mubr.bf16.mxu0 0
    %1359 = vmatmul.mubr.bf16.gmra.mrb[0].mxu0 %v1324
    %v1360 = vpop.f32.mrb[0].mxu0
    %v1361 = vadd.f32 %v1306, %v1360
    %v1362 = vpop.f32.mrb[0].mxu0
    %v1363 = vpop.f32.mrb[0].mxu0
    %v1364 = vadd.f32 %v1306, %v1363
    %v1365 = vpop.f32.mrb[0].mxu0
    %1366 = vdwg.mxu0
    %vm1367 = vcmask 31744
    %1368 = vst.msk [vmem:[%s7] sm:$0xff] %vm1367, %v1361
    %1369 = vst.msk [vmem:[%s7 + $0x8] sm:$0xff] %vm1367, %v1364
    %v1370 = vsel %vm1367, %v1361, -inf
    %1371 = vmax.xlane.f32.xlu0 %v1370
    %v1372 = vpop.xlane.xlu0 %1371
    %v1373 = vsel %vm1367, %v1364, -inf
    %1374 = vmax.xlane.f32.xlu0 %v1373
    %v1375 = vpop.xlane.xlu0 %1374
    %vm1376 = vcmp.eq.f32.partialorder %v1361, %v1372
    %vm1377 = vcmp.eq.f32.partialorder %v1364, %v1375
    %v1378 = vsel %vm1376, %v53, 4
    %v1379 = vsel %vm1377, %v53, 4
    %v1380 = vsel %vm1367, %v1378, 2147483647
    %v1381 = vand.u32 %v1380, 65535
    %v1382 = vshra.s32 %v1380, 16
    %v1383 = vcvt.s32.f32 %v1381
    %v1384 = vcvt.s32.f32 %v1382
    %1385 = vmin.xlane.f32.xlu0 %v1384
    %v1386 = vpop.xlane.xlu0 %1385
    %vm1387 = vcmp.eq.f32.partialorder %v1384, %v1386
    %v1388 = vsel %vm1387, %v1383, inf
    %1389 = vmin.xlane.f32.xlu0 %v1388
    %v1390 = vpop.xlane.xlu0 %1389
    %v1391 = vcvt.f32.s32 %v1390
    %v1392 = vcvt.f32.s32 %v1386
    %v1393 = vshll.u32 %v1392, 16
    %v1394 = vadd.s32 %v1393, %v1391
    %v1395 = vsel %vm1367, %v1379, 2147483647
    %v1396 = vand.u32 %v1395, 65535
    %v1397 = vshra.s32 %v1395, 16
    %v1398 = vcvt.s32.f32 %v1396
    %v1399 = vcvt.s32.f32 %v1397
    %1400 = vmin.xlane.f32.xlu0 %v1399
    %v1401 = vpop.xlane.xlu0 %1400
    %vm1402 = vcmp.eq.f32.partialorder %v1399, %v1401
    %v1403 = vsel %vm1402, %v1398, inf
    %1404 = vmin.xlane.f32.xlu0 %v1403
    %v1405 = vpop.xlane.xlu0 %1404
    %v1406 = vcvt.f32.s32 %v1405
    %v1407 = vcvt.f32.s32 %v1401
    %v1408 = vshll.u32 %v1407, 16
    %v1409 = vadd.s32 %v1408, %v1406
    %vm1410 = vcmask 7168
    %1411 = vst.msk [vmem:[%s8] sm:$0xff] %vm1410, %v1394
    %1412 = vst.msk [vmem:[%s8 + $0x8] sm:$0xff] %vm1410, %v1409
  $region37: #{tpu_custom_call.1} parent=0 // pred_fallthru
    _
  // Predicated region
  $region38: #{tpu_custom_call.1} parent=0 // pred_check
    _
  $region39: #{tpu_custom_call.1} parent=0 // pred_check_branch
    %1414 = sbr.rel (0) target = $region41
  $region40: #{tpu_custom_call.1} parent=0 // pred_region
    _
  $region41: #{tpu_custom_call.1} parent=0 // pred_fallthru
    _
  // Predicated region
  $region42: #{tpu_custom_call.1} parent=0 // pred_check
    _
  $region43: #{tpu_custom_call.1} parent=0 // pred_check_branch
    %1416 = sbr.rel (0) target = $region45
  $region44: #{tpu_custom_call.1} parent=0 // pred_region
    _
  $region45: #{tpu_custom_call.1} parent=0 // pred_fallthru
    _
  // Predicated region
  $region46: #{tpu_custom_call.1} parent=0 // pred_check
    _
  $region47: #{tpu_custom_call.1} parent=0 // pred_check_branch
    %1418 = sbr.rel (0) target = $region49
  $region48: #{tpu_custom_call.1} parent=0 // pred_region
    _
  $region49: #{tpu_custom_call.1} parent=0 // pred_fallthru
    _
  // Predicated region
  $region50: #{tpu_custom_call.1} parent=0 // pred_check
    _
  $region51: #{tpu_custom_call.1} parent=0 // pred_check_branch
    %1420 = sbr.rel (0) target = $region53
  $region52: #{tpu_custom_call.1} parent=0 // pred_region
    _
  $region53: #{tpu_custom_call.1} parent=0 // pred_fallthru
    _

</llo_original>
